<compile_context>
chip_gen: v6e
topology: v6e:2x2x1
jax: 0.10.0
libtpu: 0.0.40
codegen_flags: <defaults>
</compile_context>

<pallas_src>
import functools
import math

import jax
import jax.numpy as jnp
from jax import lax
from jax.experimental import pallas as pl
from jax.experimental.pallas import tpu as pltpu

NUM_EXPERTS = 4
TOP_K = 2
FF_MULT = 4                # expert hidden dim = 4 * embeddingDim
EPS = 1e-5
NEG_INF = -1e30
E_PAD = 128                # gate tensors padded to a full 128-lane tile


def _vmem_limit_bytes():
    """Per-generation VMEM budget: 3/4 of physical, capped at 96 MiB."""
    try:
        cap = getattr(pltpu.get_tpu_info(), "vmem_capacity_bytes", None)
        if cap:
            return int(min(cap * 3 // 4, 96 * 1024 * 1024))
    except Exception:
        pass
    return 48 * 1024 * 1024


# --------------------------------------------------------------------------
# shared math helpers (usable both inside kernels and in the pure-JAX reference)
# --------------------------------------------------------------------------
def _rmsnorm(v, eps):
    ms = jnp.mean(v * v, axis=-1, keepdims=True)
    return v * lax.rsqrt(ms + eps)


def _top2_mask(probs):
    """Boolean mask of the top-2 entries along the last axis (first-max wins ties).

    Reference-side helper; safe because `probs` are softmax outputs (>= 0).
    """
    E = probs.shape[-1]
    idx = lax.broadcasted_iota(jnp.int32, probs.shape, probs.ndim - 1)

    def argmax_mask(pr):
        best_val = pr[..., 0:1]
        best_idx = jnp.zeros(pr.shape[:-1] + (1,), jnp.int32)
        for e in range(1, E):
            ve = pr[..., e:e + 1]
            better = ve > best_val
            best_val = jnp.where(better, ve, best_val)
            best_idx = jnp.where(better, jnp.int32(e), best_idx)
        return idx == best_idx

    m1 = argmax_mask(probs)
    m2 = argmax_mask(jnp.where(m1, -1.0, probs))
    return m1 | m2


# --------------------------------------------------------------------------
# kernel A: fused RMSNorm + QKV projection
#   wqkv = [wq*scale | wk | wv] (D,3D) bf16, bqkv = [bq*scale | bk | bv] (1,3D)
# --------------------------------------------------------------------------
def _qkv_kernel(eps, d_model, x_ref, wqkv_ref, bqkv_ref, q_ref, k_ref, v_ref):
    x = x_ref[0]                                    # (tq, D) f32
    xn = _rmsnorm(x, eps).astype(jnp.bfloat16)      # f32 norm math, bf16 MXU operand
    qkv = (jnp.dot(xn, wqkv_ref[...], preferred_element_type=jnp.float32)
           + bqkv_ref[...])                         # (tq, 3D) f32
    q_ref[0] = qkv[:, :d_model].astype(jnp.bfloat16)
    k_ref[0] = qkv[:, d_model:2 * d_model].astype(jnp.bfloat16)
    v_ref[0] = qkv[:, 2 * d_model:].astype(jnp.bfloat16)


# --------------------------------------------------------------------------
# kernel B: flash-style causal attention, triangular KV schedule.
#   grid = (B, H, nT*(nT+1)//2); scalar-prefetched qi_of[]/ki_of[] drive the
#   Q/K/V/O index_maps, so masked-out tiles are never fetched or visited.
# --------------------------------------------------------------------------
def _flash_attn_kernel(qi_ref, ki_ref, q_ref, k_ref, v_ref, o_ref,
                       m_sc, l_sc, acc_sc):
    s_idx = pl.program_id(2)
    qi = qi_ref[s_idx]
    ki = ki_ref[s_idx]

    @pl.when(ki == 0)
    def _():
        m_sc[...] = jnp.full_like(m_sc, -jnp.inf)
        l_sc[...] = jnp.zeros_like(l_sc)
        acc_sc[...] = jnp.zeros_like(acc_sc)

    def step(masked):
        q = q_ref[0]     # (t, hd) bf16, already scaled by 1/sqrt(hd)
        k = k_ref[0]     # (t, hd) bf16
        # TODO(synk): on v5e confirm no per-step vxpose from the transposed-RHS
        # contraction; if present, emit K pre-transposed from kernel A.
        s = lax.dot_general(q, k, (((1,), (1,)), ((), ())),
                            preferred_element_type=jnp.float32)   # (t, t) f32
        if masked:
            # diagonal tile only: local row/col indices suffice (offsets equal)
            row = lax.broadcasted_iota(jnp.int32, s.shape, 0)
            col = lax.broadcasted_iota(jnp.int32, s.shape, 1)
            s = jnp.where(col <= row, s, NEG_INF)
        m_new = jnp.maximum(m_sc[...], jnp.max(s, axis=-1, keepdims=True))
        alpha = jnp.exp(m_sc[...] - m_new)
        p = jnp.exp(s - m_new)
        l_sc[...] = alpha * l_sc[...] + jnp.sum(p, axis=-1, keepdims=True)
        acc_sc[...] = alpha * acc_sc[...] + jnp.dot(
            p.astype(jnp.bfloat16), v_ref[0], preferred_element_type=jnp.float32)
        m_sc[...] = m_new

    @pl.when(ki < qi)          # off-diagonal: fully unmasked, no iota/select
    def _():
        step(False)

    @pl.when(ki == qi)         # diagonal: masked path, then finalize
    def _():
        step(True)
        inv_l = pl.reciprocal(l_sc[...], approx=True)
        o_ref[0] = (acc_sc[...] * inv_l).astype(o_ref.dtype)


# --------------------------------------------------------------------------
# kernel C: attention out-proj + residual + RMSNorm + top-2 MoE.
#   grid = (B, num_t_tiles); expert weights are grid-invariant whole blocks
#   (fetched from HBM once, VMEM-resident) and experts are looped in-kernel.
# --------------------------------------------------------------------------
def _moe_kernel(eps, n_experts, x_ref, a_ref, wo_ref, bo_ref, wg_ref, bg_ref,
                w1_ref, b1_ref, w2_ref, b2_ref, o_ref):
    # y = x + attn @ Wo + bo  (attention residual)
    y = (x_ref[0]
         + jnp.dot(a_ref[0], wo_ref[...], preferred_element_type=jnp.float32)
         + bo_ref[...])
    xn2 = _rmsnorm(y, eps)
    xn2_b = xn2.astype(jnp.bfloat16)

    # top-2 gating on a lane-padded (tq, 128) tile (padded logits are -1e30,
    # so padded lanes get exactly-zero softmax mass and can never be selected).
    logits = (jnp.dot(xn2, wg_ref[...], preferred_element_type=jnp.float32)
              + bg_ref[...])
    logits = logits - jnp.max(logits, axis=-1, keepdims=True)
    pe = jnp.exp(logits)
    probs = pe / jnp.sum(pe, axis=-1, keepdims=True)
    lane = lax.broadcasted_iota(jnp.int32, probs.shape, 1)
    big = jnp.int32(probs.shape[-1])

    def first_argmax(pr):            # lowest lane index among the row maxima
        mval = jnp.max(pr, axis=-1, keepdims=True)
        return jnp.min(jnp.where(pr == mval, lane, big), axis=-1, keepdims=True)

    m1 = lane == first_argmax(probs)
    m2 = lane == first_argmax(jnp.where(m1, -1.0, probs))
    gate = jnp.where(m1 | m2, probs, 0.0)
    gate = gate / jnp.sum(gate, axis=-1, keepdims=True)

    # TODO(synk): dense top-2 evaluation (all experts weighted) does 2x the
    # required FFN FLOPs; sparse dispatch needs scalar-prefetched per-expert
    # token offsets + gather/scatter of the selected rows.
    acc = jnp.zeros_like(y)
    for e in range(n_experts):       # experts VMEM-resident; unrolled in-kernel
        h = (jnp.dot(xn2_b, w1_ref[e], preferred_element_type=jnp.float32)
             + b1_ref[e])
        # TODO(synk): PyTorch nn.GELU defaults to exact erf; tanh approx used.
        h = jax.nn.gelu(h, approximate=True)
        ye = (jnp.dot(h.astype(jnp.bfloat16), w2_ref[e],
                      preferred_element_type=jnp.float32) + b2_ref[e])
        g = jnp.sum(jnp.where(lane == e, gate, 0.0), axis=-1, keepdims=True)
        acc = acc + g * ye

    o_ref[0] = (y + acc).astype(o_ref.dtype)


# --------------------------------------------------------------------------
# wrapper
# --------------------------------------------------------------------------
def _whole(p):
    nd = p.ndim
    return pl.BlockSpec(p.shape, lambda *_, nd=nd: (0,) * nd)


def decoder_block(x, params, *, num_heads, eps=EPS, tq=256, t_attn=128):
    """Pre-norm DecoderBlock forward. x: (B, T, D) f32."""
    B, T, D = x.shape
    H = num_heads
    assert D % H == 0
    hd = D // H
    assert D % 128 == 0 and hd % 128 == 0, "lane-dense layout needs D, hd % 128 == 0"
    tq = min(tq, T)
    t_attn = min(t_attn, T)
    assert T % tq == 0 and T % t_attn == 0
    nTp = T // tq
    nTa = T // t_attn
    E = NUM_EXPERTS
    HID = params["w1"].shape[-1]
    scale = 1.0 / math.sqrt(hd)
    bf16 = jnp.bfloat16
    vmem = _vmem_limit_bytes()

    # one-time param prep: fused QKV weight with the attention scale folded in,
    # bf16 MXU operands, lane-padded gate weights (f32 so routing stays exact).
    wqkv = jnp.concatenate(
        [params["wq"] * scale, params["wk"], params["wv"]], axis=1).astype(bf16)
    bqkv = jnp.concatenate(
        [params["bq"] * scale, params["bk"], params["bv"]], axis=1)
    wo = params["wo"].astype(bf16)
    bo = params["bo"]
    wg_pad = jnp.zeros((D, E_PAD), jnp.float32).at[:, :E].set(params["wg"])
    bg_pad = jnp.full((1, E_PAD), NEG_INF, jnp.float32).at[:, :E].set(params["bg"])
    w1 = params["w1"].astype(bf16)
    w2 = params["w2"].astype(bf16)
    b1 = params["b1"].reshape(E, 1, HID)
    b2 = params["b2"].reshape(E, 1, D)

    def cparams(sem):
        return pltpu.CompilerParams(dimension_semantics=sem,
                                    vmem_limit_bytes=vmem)

    # ---- kernel A: RMSNorm + fused QKV projection ----
    # TODO(synk): for large D (>~3k; earlier on v7x's 64 MiB) stream wqkv over
    # an output-column grid axis instead of keeping it whole-resident.
    q, k, v = pl.pallas_call(
        functools.partial(_qkv_kernel, eps, D),
        out_shape=[jax.ShapeDtypeStruct((B, T, D), bf16)] * 3,
        grid=(B, nTp),
        in_specs=[pl.BlockSpec((1, tq, D), lambda b, t: (b, t, 0)),
                  _whole(wqkv), _whole(bqkv)],
        out_specs=[pl.BlockSpec((1, tq, D), lambda b, t: (b, t, 0))] * 3,
        compiler_params=cparams(("parallel", "parallel")),
    )(x, wqkv, bqkv)

    # ---- kernel B: flash attention, triangular causal schedule ----
    tri = [(qi, ki) for qi in range(nTa) for ki in range(qi + 1)]
    qi_of = jnp.asarray([t[0] for t in tri], jnp.int32)
    ki_of = jnp.asarray([t[1] for t in tri], jnp.int32)
    S = len(tri)

    ctx = pl.pallas_call(
        _flash_attn_kernel,
        out_shape=jax.ShapeDtypeStruct((B, T, D), bf16),
        grid_spec=pltpu.PrefetchScalarGridSpec(
            num_scalar_prefetch=2,
            grid=(B, H, S),
            in_specs=[
                pl.BlockSpec((1, t_attn, hd), lambda b, h, s, qi, ki: (b, qi[s], h)),
                pl.BlockSpec((1, t_attn, hd), lambda b, h, s, qi, ki: (b, ki[s], h)),
                pl.BlockSpec((1, t_attn, hd), lambda b, h, s, qi, ki: (b, ki[s], h)),
            ],
            out_specs=pl.BlockSpec((1, t_attn, hd),
                                   lambda b, h, s, qi, ki: (b, qi[s], h)),
            scratch_shapes=[pltpu.VMEM((t_attn, 1), jnp.float32),
                            pltpu.VMEM((t_attn, 1), jnp.float32),
                            pltpu.VMEM((t_attn, hd), jnp.float32)]),
        compiler_params=cparams(("parallel", "parallel", "arbitrary")),
    )(qi_of, ki_of, q, k, v)

    # ---- kernel C: out-proj + residual + RMSNorm + top-2 MoE (resident experts) ----
    # TODO(synk): on v7x (64 MiB VMEM) with large D, add a HID-tiling grid axis
    # for the expert matmuls and mark the invariant operands pl.Buffered(1).
    out = pl.pallas_call(
        functools.partial(_moe_kernel, eps, E),
        out_shape=jax.ShapeDtypeStruct((B, T, D), jnp.float32),
        grid=(B, nTp),
        in_specs=[pl.BlockSpec((1, tq, D), lambda b, t: (b, t, 0)),      # x
                  pl.BlockSpec((1, tq, D), lambda b, t: (b, t, 0)),      # attn ctx
                  _whole(wo), _whole(bo), _whole(wg_pad), _whole(bg_pad),
                  _whole(w1), _whole(b1), _whole(w2), _whole(b2)],
        out_specs=pl.BlockSpec((1, tq, D), lambda b, t: (b, t, 0)),
        compiler_params=cparams(("parallel", "parallel")),
    )(x, ctx, wo, bo, wg_pad, bg_pad, w1, b1, w2, b2)
    # TODO(synk): only the default ('pre_norm') decoder_architechture branch is
    # implemented; other config branches reuse the same kernels with reordering.
    return out


# --------------------------------------------------------------------------
# pure-JAX reference (same bf16-operand / f32-accumulate precision policy,
# same scale-folded QKV weights)
# --------------------------------------------------------------------------
def _reference(x, params, *, num_heads, eps=EPS):
    B, T, D = x.shape
    H = num_heads
    hd = D // H
    scale = 1.0 / math.sqrt(hd)
    bf = lambda a: a.astype(jnp.bfloat16)
    dot = lambda a, b: jnp.dot(a, b, preferred_element_type=jnp.float32)
    p = params
    wq = bf(p["wq"] * scale)
    wk, wv, wo = bf(p["wk"]), bf(p["wv"]), bf(p["wo"])
    w1, w2 = bf(p["w1"]), bf(p["w2"])

    xn = _rmsnorm(x, eps)
    xnb = bf(xn)
    q = dot(xnb, wq) + p["bq"] * scale
    k = dot(xnb, wk) + p["bk"]
    v = dot(xnb, wv) + p["bv"]
    qh = bf(q).reshape(B, T, H, hd).transpose(0, 2, 1, 3)
    kh = bf(k).reshape(B, T, H, hd).transpose(0, 2, 1, 3)
    vh = bf(v).reshape(B, T, H, hd).transpose(0, 2, 1, 3)
    s = jnp.einsum("bhqd,bhkd->bhqk", qh, kh, preferred_element_type=jnp.float32)
    row = lax.broadcasted_iota(jnp.int32, (T, T), 0)
    col = lax.broadcasted_iota(jnp.int32, (T, T), 1)
    s = jnp.where(col <= row, s, NEG_INF)
    s = s - jnp.max(s, axis=-1, keepdims=True)
    pr = jnp.exp(s)
    pr = pr / jnp.sum(pr, axis=-1, keepdims=True)
    ctx = jnp.einsum("bhqk,bhkd->bhqd", bf(pr), vh, preferred_element_type=jnp.float32)
    ctx = ctx.transpose(0, 2, 1, 3).reshape(B, T, D)
    y = x + dot(bf(ctx), wo) + p["bo"]

    xn2 = _rmsnorm(y, eps)
    logits = dot(xn2, p["wg"]) + p["bg"]
    probs = jax.nn.softmax(logits, axis=-1)
    sel = _top2_mask(probs)
    gate = jnp.where(sel, probs, 0.0)
    gate = gate / jnp.sum(gate, axis=-1, keepdims=True)
    moe = jnp.zeros_like(y)
    for e in range(NUM_EXPERTS):
        h = dot(bf(xn2), w1[e]) + p["b1"][e]
        h = jax.nn.gelu(h, approximate=True)
        ye = dot(bf(h), w2[e]) + p["b2"][e]
        moe = moe + gate[..., e:e + 1] * ye
    return y + moe


def init_params(key, D):
    E, HID = NUM_EXPERTS, FF_MULT * D
    ks = jax.random.split(key, 14)

    def w(k, shape, s=0.02):
        return jax.random.normal(k, shape, jnp.float32) * s

    return dict(
        wq=w(ks[0], (D, D)), bq=w(ks[1], (1, D), 0.01),
        wk=w(ks[2], (D, D)), bk=w(ks[3], (1, D), 0.01),
        wv=w(ks[4], (D, D)), bv=w(ks[5], (1, D), 0.01),
        wo=w(ks[6], (D, D)), bo=w(ks[7], (1, D), 0.01),
        wg=w(ks[8], (D, E)), bg=w(ks[9], (1, E), 0.01),
        w1=w(ks[10], (E, D, HID)), b1=w(ks[11], (E, HID), 0.01),
        w2=w(ks[12], (E, HID, D)), b2=w(ks[13], (E, D), 0.01),
    )


if __name__ == "__main__":
    # small but lane-dense shapes: batch=2, seq=256, embed=256, heads=2 (hd=128);
    # t_attn=128 -> 2 KV tiles so the triangular flash schedule is exercised.
    B, T, D, H = 2, 256, 256, 2

    key = jax.random.PRNGKey(0)
    kx, kp = jax.random.split(key)
    x = jax.random.normal(kx, (B, T, D), jnp.float32)
    params = init_params(kp, D)

    out = decoder_block(x, params, num_heads=H, tq=256, t_attn=128)
    out = jax.block_until_ready(out)

    ref = _reference(x, params, num_heads=H)
    assert out.shape == (B, T, D) and out.dtype == jnp.float32
    max_err = jnp.max(jnp.abs(out - ref))
    assert jnp.allclose(out, ref, atol=1e-2, rtol=1e-2), (
        f"mismatch vs reference (max abs err {max_err})")
    print("KERNEL_OK")
</pallas_src>

<mosaic_0001>
module attributes {stable_mosaic.version = 11 : i64} {
  func.func @_qkv_kernel(%arg0: i32, %arg1: i32, %arg2: memref<1x256x256xf32, #tpu.memory_space<vmem>>, %arg3: memref<256x768xbf16, #tpu.memory_space<vmem>>, %arg4: memref<1x768xf32, #tpu.memory_space<vmem>>, %arg5: memref<1x256x256xbf16, #tpu.memory_space<vmem>>, %arg6: memref<1x256x256xbf16, #tpu.memory_space<vmem>>, %arg7: memref<1x256x256xbf16, #tpu.memory_space<vmem>>) attributes {dimension_semantics = [#tpu.dimension_semantics<parallel>, #tpu.dimension_semantics<parallel>], iteration_bounds = array<i64: 2, 1>, scalar_prefetch = 0 : i64, scratch_operands = 0 : i64, tpu.core_type = #tpu.core_type<tc>, window_params = [{transform_indices = @transform_0, window_bounds = array<i64: 1, 256, 256>}, {pipeline_mode = #tpu.pipeline_mode<synchronous>, transform_indices = @transform_1, window_bounds = array<i64: 256, 768>}, {pipeline_mode = #tpu.pipeline_mode<synchronous>, transform_indices = @transform_2, window_bounds = array<i64: 1, 768>}, {transform_indices = @transform_3, window_bounds = array<i64: 1, 256, 256>}, {transform_indices = @transform_4, window_bounds = array<i64: 1, 256, 256>}, {transform_indices = @transform_5, window_bounds = array<i64: 1, 256, 256>}]} {
    %c0 = arith.constant 0 : index
    %c0_0 = arith.constant 0 : index
    %c0_1 = arith.constant 0 : index
    %0 = vector.load %arg2[%c0, %c0_0, %c0_1] : memref<1x256x256xf32, #tpu.memory_space<vmem>>, vector<1x256x256xf32>
    %1 = vector.shape_cast %0 : vector<1x256x256xf32> to vector<256x256xf32>
    %2 = arith.mulf %1, %1 : vector<256x256xf32>
    %cst = arith.constant dense<0.000000e+00> : vector<256xf32>
    %3 = vector.multi_reduction <add>, %2, %cst [1] : vector<256x256xf32> to vector<256xf32>
    %4 = vector.shape_cast %3 : vector<256xf32> to vector<256x1xf32>
    %cst_2 = arith.constant 2.560000e+02 : f32
    %5 = vector.broadcast %cst_2 : f32 to vector<256x1xf32>
    %6 = arith.divf %4, %5 : vector<256x1xf32>
    %cst_3 = arith.constant 9.99999974E-6 : f32
    %7 = vector.broadcast %cst_3 : f32 to vector<256x1xf32>
    %8 = arith.addf %6, %7 : vector<256x1xf32>
    %9 = math.rsqrt %8 : vector<256x1xf32>
    %10 = vector.broadcast %9 : vector<256x1xf32> to vector<256x256xf32>
    %11 = arith.mulf %1, %10 : vector<256x256xf32>
    %12 = arith.truncf %11 : vector<256x256xf32> to vector<256x256xbf16>
    %c0_4 = arith.constant 0 : index
    %c0_5 = arith.constant 0 : index
    %13 = vector.load %arg3[%c0_4, %c0_5] : memref<256x768xbf16, #tpu.memory_space<vmem>>, vector<256x768xbf16>
    %cst_6 = arith.constant dense<0.000000e+00> : vector<256x768xf32>
    %14 = tpu.matmul %12, %13, %cst_6 {dimension_numbers = #tpu.dot_dimension_numbers<[1], [0], [0], [1], [0, 0, 1, 1], [], []>} : vector<256x256xbf16>, vector<256x768xbf16>, vector<256x768xf32> -> vector<256x768xf32>
    %c0_7 = arith.constant 0 : index
    %c0_8 = arith.constant 0 : index
    %15 = vector.load %arg4[%c0_7, %c0_8] : memref<1x768xf32, #tpu.memory_space<vmem>>, vector<1x768xf32>
    %16 = vector.broadcast %15 : vector<1x768xf32> to vector<256x768xf32>
    %17 = arith.addf %14, %16 : vector<256x768xf32>
    %18 = vector.extract_strided_slice %17 {offsets = [0, 0], sizes = [256, 256], strides = [1, 1]} : vector<256x768xf32> to vector<256x256xf32>
    %19 = arith.truncf %18 : vector<256x256xf32> to vector<256x256xbf16>
    %c0_9 = arith.constant 0 : index
    %c0_10 = arith.constant 0 : index
    %c0_11 = arith.constant 0 : index
    %20 = vector.load %arg5[%c0_9, %c0_10, %c0_11] : memref<1x256x256xbf16, #tpu.memory_space<vmem>>, vector<1x256x256xbf16>
    %21 = vector.shape_cast %20 : vector<1x256x256xbf16> to vector<256x256xbf16>
    %22 = vector.shape_cast %19 : vector<256x256xbf16> to vector<1x256x256xbf16>
    tpu.vector_store %arg5[%c0_9, %c0_10, %c0_11], %22 {strides = array<i32>} : memref<1x256x256xbf16, #tpu.memory_space<vmem>>, vector<1x256x256xbf16>,
    %23 = vector.extract_strided_slice %17 {offsets = [0, 256], sizes = [256, 256], strides = [1, 1]} : vector<256x768xf32> to vector<256x256xf32>
    %24 = arith.truncf %23 : vector<256x256xf32> to vector<256x256xbf16>
    %c0_12 = arith.constant 0 : index
    %c0_13 = arith.constant 0 : index
    %c0_14 = arith.constant 0 : index
    %25 = vector.load %arg6[%c0_12, %c0_13, %c0_14] : memref<1x256x256xbf16, #tpu.memory_space<vmem>>, vector<1x256x256xbf16>
    %26 = vector.shape_cast %25 : vector<1x256x256xbf16> to vector<256x256xbf16>
    %27 = vector.shape_cast %24 : vector<256x256xbf16> to vector<1x256x256xbf16>
    tpu.vector_store %arg6[%c0_12, %c0_13, %c0_14], %27 {strides = array<i32>} : memref<1x256x256xbf16, #tpu.memory_space<vmem>>, vector<1x256x256xbf16>,
    %28 = vector.extract_strided_slice %17 {offsets = [0, 512], sizes = [256, 256], strides = [1, 1]} : vector<256x768xf32> to vector<256x256xf32>
    %29 = arith.truncf %28 : vector<256x256xf32> to vector<256x256xbf16>
    %c0_15 = arith.constant 0 : index
    %c0_16 = arith.constant 0 : index
    %c0_17 = arith.constant 0 : index
    %30 = vector.load %arg7[%c0_15, %c0_16, %c0_17] : memref<1x256x256xbf16, #tpu.memory_space<vmem>>, vector<1x256x256xbf16>
    %31 = vector.shape_cast %30 : vector<1x256x256xbf16> to vector<256x256xbf16>
    %32 = vector.shape_cast %29 : vector<256x256xbf16> to vector<1x256x256xbf16>
    tpu.vector_store %arg7[%c0_15, %c0_16, %c0_17], %32 {strides = array<i32>} : memref<1x256x256xbf16, #tpu.memory_space<vmem>>, vector<1x256x256xbf16>,
    return
  }
  func.func @transform_0(%arg0: i32, %arg1: i32) -> (i32, i32, i32) {
    %c0_i32 = arith.constant 0 : i32
    %c0_i32_0 = arith.constant 0 : i32
    return %arg0, %arg1, %c0_i32 : i32, i32, i32
  }
  func.func @transform_1(%arg0: i32, %arg1: i32) -> (i32, i32) {
    %c0_i32 = arith.constant 0 : i32
    %c0_i32_0 = arith.constant 0 : i32
    %c0_i32_1 = arith.constant 0 : i32
    return %c0_i32, %c0_i32_0 : i32, i32
  }
  func.func @transform_2(%arg0: i32, %arg1: i32) -> (i32, i32) {
    %c0_i32 = arith.constant 0 : i32
    %c0_i32_0 = arith.constant 0 : i32
    %c0_i32_1 = arith.constant 0 : i32
    return %c0_i32, %c0_i32_0 : i32, i32
  }
  func.func @transform_3(%arg0: i32, %arg1: i32) -> (i32, i32, i32) {
    %c0_i32 = arith.constant 0 : i32
    %c0_i32_0 = arith.constant 0 : i32
    return %arg0, %arg1, %c0_i32 : i32, i32, i32
  }
  func.func @transform_4(%arg0: i32, %arg1: i32) -> (i32, i32, i32) {
    %c0_i32 = arith.constant 0 : i32
    %c0_i32_0 = arith.constant 0 : i32
    return %arg0, %arg1, %c0_i32 : i32, i32, i32
  }
  func.func @transform_5(%arg0: i32, %arg1: i32) -> (i32, i32, i32) {
    %c0_i32 = arith.constant 0 : i32
    %c0_i32_0 = arith.constant 0 : i32
    return %arg0, %arg1, %c0_i32 : i32, i32, i32
  }
}

</mosaic_0001>

<llo_original>
// kernel: tpu_custom_call.1
$region0: #{tpu_custom_call.1}
  #allocation0 [shape = 'u32[]', space=smem, size = 0x4, offset = 0x4, fixed_abs, tag = 'smem constant byte address 0x4 - core index']
  #allocation1 [shape = 'u32[144,128]{1,0:T(1,128)}', space=vmem, size = 0x12000, scoped, tag = 'internal scratch']
  %s0 = inlined_call_operand.hbm [shape: f32[2,256,256], index: 0, kind: input, shape index: {}]
  %s1 = inlined_call_operand.hbm [shape: bf16[256,768], index: 1, kind: input, shape index: {}]
  %s2 = inlined_call_operand.hbm [shape: f32[1,768], index: 2, kind: input, shape index: {}]
  %s3 = inlined_call_operand.hbm [shape: bf16[2,256,256], index: 3, kind: output, shape index: {0}]
  %s4 = inlined_call_operand.hbm [shape: bf16[2,256,256], index: 4, kind: output, shape index: {1}]
  %s5 = inlined_call_operand.hbm [shape: bf16[2,256,256], index: 5, kind: output, shape index: {2}]
  %6 = xla_tuple %s3, %s4, %s5
  %s7 = sld [smem:[#allocation0]]
  $region73: #{tpu_custom_call.1} parent=0
    _
  %s9 = ssub.s32 1, %s7
  %s10 = scalar_select 0, %s9, %s7
  $region1: #{tpu_custom_call.1} parent=0
    #allocation2 [shape = 'u8[524288]{0}', space=vmem, size = 0x80000, scoped, tag = 'input window, operand 0']
    #allocation3 [shape = 's32[2]{0}', space=sflag, size = 0x8, scoped, tag = 'scoped memory for tpu_custom_call.1']
    #allocation4 [shape = 's32[2]{0}', space=sflag, size = 0x8, scoped, tag = 'scoped memory for tpu_custom_call.1']
    #allocation5 [shape = 'u8[393216]{0}', space=vmem, size = 0x60000, scoped, tag = 'input window, operand 1, single buffered']
    #allocation6 [shape = 's32[1]{0}', space=sflag, size = 0x4, scoped, tag = 'scoped memory for tpu_custom_call.1']
    #allocation7 [shape = 'u8[3072]{0}', space=vmem, size = 0xc00, scoped, tag = 'input window, operand 2, single buffered']
    #allocation8 [shape = 'u8[262144]{0}', space=vmem, size = 0x40000, scoped, tag = 'output window, operand 0']
    #allocation9 [shape = 'u8[262144]{0}', space=vmem, size = 0x40000, scoped, tag = 'output window, operand 1']
    #allocation10 [shape = 's32[2]{0}', space=sflag, size = 0x8, scoped, tag = 'scoped memory for tpu_custom_call.1']
    #allocation11 [shape = 'u8[262144]{0}', space=vmem, size = 0x40000, scoped, tag = 'output window, operand 2']
    %11 = vsyncpa [#allocation3], 0
    %s12 = scalar_lea.sflag [#allocation3], 1
    %13 = vsyncpa %s12, 0
    %14 = vsyncpa [#allocation6], 0
    %15 = vsyncpa [#allocation4], 0
    %s16 = scalar_lea.sflag [#allocation4], 1
    %17 = vsyncpa %s16, 0
    %18 = vsyncpa [#allocation10], 0
    %s19 = scalar_lea.sflag [#allocation10], 1
    %20 = vsyncpa %s19, 0
    loop: start=0, step=1, limit=4
    $region2: #{tpu_custom_call.1} parent=1 // loop_pre_header
      _
    $region3: #{tpu_custom_call.1} parent=1 // loop_header
      %s22 = sphi 0, %s26
      %p23 = scmp.ge.s32.totalorder %s22, 4
      %s29 = sphi 0, %s41
      %s30 = sphi 0, %s37
      %s31 = sphi 0, %s29
      %s32 = sphi 0, %s30
      %s33 = sphi 0, %s31
      %s34 = sphi 0, %s32
      %s46 = sphi 0, %s48
      %s49 = sphi 0, %s46
      %s50 = sphi 0, %s49
      %s66 = sphi 0, %s50
      %s70 = sphi 0, %s70
      %s72 = sphi 0, %s70
      %s73 = sphi 0, %s72
      %s87 = sphi 0, %s73
      %s91 = sphi 0, %s91
      %s93 = sphi 0, %s91
      %s94 = sphi 0, %s93
      %s108 = sphi 0, %s94
      %s116 = sphi 0, %s118
      %s119 = sphi 0, %s116
      %s120 = sphi 0, %s119
      %s136 = sphi 0, %s120
      %s144 = sphi 0, %s146
      %s147 = sphi 0, %s144
      %s148 = sphi 0, %s147
      %s164 = sphi 0, %s148
      %s172 = sphi 0, %s174
      %s175 = sphi 0, %s172
      %s176 = sphi 0, %s175
      %s192 = sphi 0, %s176
    $region4: #{tpu_custom_call.1} parent=1 // loop_header_branch
      %25 = sbr.rel (%p23) target = $region8
    $region5: #{tpu_custom_call.1} parent=1 // loop_body
      %s27 = ssub.s32 %s22, 1
      %s28 = ssub.s32 %s22, 2
      %s35 = sadd.s32 1, %s30
      %p36 = scmp.ge.s32.totalorder %s35, 1
      %s37 = scalar_select %p36, 0, %s35
      %s38 = sadd.s32 1, %s29
      %s39 = scalar_select %p36, %s38, %s29
      %p40 = scmp.ge.s32.totalorder %s39, 2
      %s41 = scalar_select %p40, 0, %s39
      %s42 = ssub.s32 %s29, %s41
      %s43 = ssub.s32 %s30, %s37
      %s44 = sor.u32 %s42, %s43
      %p45 = scmp.eq.s32.totalorder %s44, 0
      %s47 = sadd.s32 %s46, 1
      %s48 = scalar_select %p45, %s46, %s47
      %p51 = pneg %p45
      %p52 = scmp.eq.s32.totalorder %s22, 1
      %p53 = por %p51, %p52
      %p54 = scmp.ne.s32.totalorder %s46, %s49
      %p55 = scmp.eq.s32.totalorder %s22, 0
      %p56 = por %p54, %p55
      %p57 = scmp.ne.s32.totalorder %s46, %s49
      %p58 = scmp.eq.s32.totalorder %s27, 1
      %p59 = por %p57, %p58
      %p60 = scmp.ne.s32.totalorder %s49, %s50
      %p61 = scmp.eq.s32.totalorder %s27, 0
      %p62 = por %p60, %p61
      %p63 = scmp.ne.s32.totalorder %s49, %s50
      %p64 = scmp.eq.s32.totalorder %s28, 1
      %p65 = por %p63, %p64
      %p67 = scmp.ne.s32.totalorder %s50, %s66
      %p68 = scmp.eq.s32.totalorder %s28, 0
      %p69 = por %p67, %p68
      %s71 = sadd.s32 %s70, 1
      %p74 = scmp.eq.s32.totalorder %s22, 1
      %p75 = scmp.ne.s32.totalorder %s70, %s72
      %p76 = scmp.eq.s32.totalorder %s22, 0
      %p77 = por %p75, %p76
      %p78 = scmp.ne.s32.totalorder %s70, %s72
      %p79 = scmp.eq.s32.totalorder %s27, 1
      %p80 = por %p78, %p79
      %p81 = scmp.ne.s32.totalorder %s72, %s73
      %p82 = scmp.eq.s32.totalorder %s27, 0
      %p83 = por %p81, %p82
      %p84 = scmp.ne.s32.totalorder %s72, %s73
      %p85 = scmp.eq.s32.totalorder %s28, 1
      %p86 = por %p84, %p85
      %p88 = scmp.ne.s32.totalorder %s73, %s87
      %p89 = scmp.eq.s32.totalorder %s28, 0
      %p90 = por %p88, %p89
      %s92 = sadd.s32 %s91, 1
      %p95 = scmp.eq.s32.totalorder %s22, 1
      %p96 = scmp.ne.s32.totalorder %s91, %s93
      %p97 = scmp.eq.s32.totalorder %s22, 0
      %p98 = por %p96, %p97
      %p99 = scmp.ne.s32.totalorder %s91, %s93
      %p100 = scmp.eq.s32.totalorder %s27, 1
      %p101 = por %p99, %p100
      %p102 = scmp.ne.s32.totalorder %s93, %s94
      %p103 = scmp.eq.s32.totalorder %s27, 0
      %p104 = por %p102, %p103
      %p105 = scmp.ne.s32.totalorder %s93, %s94
      %p106 = scmp.eq.s32.totalorder %s28, 1
      %p107 = por %p105, %p106
      %p109 = scmp.ne.s32.totalorder %s94, %s108
      %p110 = scmp.eq.s32.totalorder %s28, 0
      %p111 = por %p109, %p110
      %s112 = ssub.s32 %s29, %s41
      %s113 = ssub.s32 %s30, %s37
      %s114 = sor.u32 %s112, %s113
      %p115 = scmp.eq.s32.totalorder %s114, 0
      %s117 = sadd.s32 %s116, 1
      %s118 = scalar_select %p115, %s116, %s117
      %p121 = pneg %p115
      %p122 = scmp.eq.s32.totalorder %s22, 1
      %p123 = por %p121, %p122
      %p124 = scmp.ne.s32.totalorder %s116, %s119
      %p125 = scmp.eq.s32.totalorder %s22, 0
      %p126 = por %p124, %p125
      %p127 = scmp.ne.s32.totalorder %s116, %s119
      %p128 = scmp.eq.s32.totalorder %s27, 1
      %p129 = por %p127, %p128
      %p130 = scmp.ne.s32.totalorder %s119, %s120
      %p131 = scmp.eq.s32.totalorder %s27, 0
      %p132 = por %p130, %p131
      %p133 = scmp.ne.s32.totalorder %s119, %s120
      %p134 = scmp.eq.s32.totalorder %s28, 1
      %p135 = por %p133, %p134
      %p137 = scmp.ne.s32.totalorder %s120, %s136
      %p138 = scmp.eq.s32.totalorder %s28, 0
      %p139 = por %p137, %p138
      %s140 = ssub.s32 %s29, %s41
      %s141 = ssub.s32 %s30, %s37
      %s142 = sor.u32 %s140, %s141
      %p143 = scmp.eq.s32.totalorder %s142, 0
      %s145 = sadd.s32 %s144, 1
      %s146 = scalar_select %p143, %s144, %s145
      %p149 = pneg %p143
      %p150 = scmp.eq.s32.totalorder %s22, 1
      %p151 = por %p149, %p150
      %p152 = scmp.ne.s32.totalorder %s144, %s147
      %p153 = scmp.eq.s32.totalorder %s22, 0
      %p154 = por %p152, %p153
      %p155 = scmp.ne.s32.totalorder %s144, %s147
      %p156 = scmp.eq.s32.totalorder %s27, 1
      %p157 = por %p155, %p156
      %p158 = scmp.ne.s32.totalorder %s147, %s148
      %p159 = scmp.eq.s32.totalorder %s27, 0
      %p160 = por %p158, %p159
      %p161 = scmp.ne.s32.totalorder %s147, %s148
      %p162 = scmp.eq.s32.totalorder %s28, 1
      %p163 = por %p161, %p162
      %p165 = scmp.ne.s32.totalorder %s148, %s164
      %p166 = scmp.eq.s32.totalorder %s28, 0
      %p167 = por %p165, %p166
      %s168 = ssub.s32 %s29, %s41
      %s169 = ssub.s32 %s30, %s37
      %s170 = sor.u32 %s168, %s169
      %p171 = scmp.eq.s32.totalorder %s170, 0
      %s173 = sadd.s32 %s172, 1
      %s174 = scalar_select %p171, %s172, %s173
      %p177 = pneg %p171
      %p178 = scmp.eq.s32.totalorder %s22, 1
      %p179 = por %p177, %p178
      %p180 = scmp.ne.s32.totalorder %s172, %s175
      %p181 = scmp.eq.s32.totalorder %s22, 0
      %p182 = por %p180, %p181
      %p183 = scmp.ne.s32.totalorder %s172, %s175
      %p184 = scmp.eq.s32.totalorder %s27, 1
      %p185 = por %p183, %p184
      %p186 = scmp.ne.s32.totalorder %s175, %s176
      %p187 = scmp.eq.s32.totalorder %s27, 0
      %p188 = por %p186, %p187
      %p189 = scmp.ne.s32.totalorder %s175, %s176
      %p190 = scmp.eq.s32.totalorder %s28, 1
      %p191 = por %p189, %p190
      %p193 = scmp.ne.s32.totalorder %s176, %s192
      %p194 = scmp.eq.s32.totalorder %s28, 0
      %p195 = por %p193, %p194
      %p196 = scmp.le.s32.totalorder 1, %s22
      %p197 = scmp.lt.s32.totalorder %s22, 3
      %p198 = pnand %p196, %p197
      %p199 = pneg %p198
      // Predicated region
      $region9: #{tpu_custom_call.1} parent=5 // pred_check
        _
      $region10: #{tpu_custom_call.1} parent=5 // pred_check_branch
        %201 = sbr.rel (%p198) target = $region12
      $region11: #{tpu_custom_call.1} parent=5 // pred_region
        %s202 = ssub.s32 %s22, 1
        // Predicated region
        $region13: #{tpu_custom_call.1} parent=11 // pred_check
          %p203 = pneg %p83
        $region14: #{tpu_custom_call.1} parent=11 // pred_check_branch
          %205 = sbr.rel (%p203) target = $region16
        $region15: #{tpu_custom_call.1} parent=11 // pred_region
          %s207 = ssub.s32 12288, 12288
          %208 = vsyncadd [#allocation6], %s207
          %s209 = sshll.u32 [#allocation5], 4
          %s210 = int_to_ptr.vmem [resolvable:$true] %s209
          %215 = dma.hbm_to_vmem [thread:$0]  %s1, 12288, %s210, [#allocation6], 384, 384, 24
        $region16: #{tpu_custom_call.1} parent=11 // pred_fallthru
          _
        // Predicated region
        $region17: #{tpu_custom_call.1} parent=11 // pred_check
          %p216 = pneg %p104
        $region18: #{tpu_custom_call.1} parent=11 // pred_check_branch
          %218 = sbr.rel (%p216) target = $region20
        $region19: #{tpu_custom_call.1} parent=11 // pred_region
          %s220 = ssub.s32 96, 96
          %221 = vsyncadd [#allocation6], %s220
          %s223 = sshll.u32 [#allocation7], 4
          %s224 = int_to_ptr.vmem [resolvable:$true] %s223
          %226 = dma.hbm_to_vmem [thread:$0]  %s2, 96, %s224, [#allocation6]
        $region20: #{tpu_custom_call.1} parent=11 // pred_fallthru
          _
      $region12: #{tpu_custom_call.1} parent=5 // pred_fallthru
        _
      %p227 = scmp.lt.s32.totalorder %s22, 2
      // Predicated region
      $region21: #{tpu_custom_call.1} parent=5 // pred_check
        %p228 = pneg %p227
      $region22: #{tpu_custom_call.1} parent=5 // pred_check_branch
        %230 = sbr.rel (%p228) target = $region24
      $region23: #{tpu_custom_call.1} parent=5 // pred_region
        // Predicated region
        $region25: #{tpu_custom_call.1} parent=23 // pred_check
          %p231 = pneg %p56
        $region26: #{tpu_custom_call.1} parent=23 // pred_check_branch
          %233 = sbr.rel (%p231) target = $region28
        $region27: #{tpu_custom_call.1} parent=23 // pred_region
          %s234 = sand.u32 %s46, 1
          %s235 = scalar_lea.sflag [#allocation3], %s234
          %s236 = sand.u32 %s46, 1
          %s237 = smul.addr %s236, 512
          %s238 = scalar_lea.vmem [#allocation2], %s237
          %s239 = smul.u32 32, %s30
          %s241 = ssub.s32 8192, 8192
          %242 = vsyncadd %s235, %s241
          %s243 = smul.addr %s239, 2
          %s244 = smul.addr %s29, 64
          %s245 = sadd.s32 %s243, %s244
          %s246 = smul.addr %s245, 128
          %s247 = scalar_lea.hbm %s0, %s246
          %s248 = sshll.u32 %s238, 4
          %s249 = int_to_ptr.vmem [resolvable:$true] %s248
          %254 = dma.hbm_to_vmem [thread:$0]  %s247, 8192, %s249, %s235, 256, 256, 16
        $region28: #{tpu_custom_call.1} parent=23 // pred_fallthru
          _
      $region24: #{tpu_custom_call.1} parent=5 // pred_fallthru
        _
      %p255 = scmp.le.s32.totalorder 1, %s22
      %p256 = scmp.lt.s32.totalorder %s22, 3
      %p257 = pnand %p255, %p256
      %p258 = pneg %p257
      // Predicated region
      $region29: #{tpu_custom_call.1} parent=5 // pred_check
        _
      $region30: #{tpu_custom_call.1} parent=5 // pred_check_branch
        %260 = sbr.rel (%p257) target = $region32
      $region31: #{tpu_custom_call.1} parent=5 // pred_region
        %s261 = ssub.s32 %s22, 1
        %s262 = sand.u32 %s49, 1
        %s263 = scalar_lea.sflag [#allocation3], %s262
        %s264 = sand.u32 %s49, 1
        %s265 = smul.addr %s264, 512
        %s266 = scalar_lea.vmem [#allocation2], %s265
        // Predicated region
        $region33: #{tpu_custom_call.1} parent=31 // pred_check
          %p267 = pneg %p62
        $region34: #{tpu_custom_call.1} parent=31 // pred_check_branch
          %269 = sbr.rel (%p267) target = $region36
        $region35: #{tpu_custom_call.1} parent=31 // pred_region
          %270 = dma.done %s263, 8192
        $region36: #{tpu_custom_call.1} parent=31 // pred_fallthru
          _
        // Predicated region
        $region37: #{tpu_custom_call.1} parent=31 // pred_check
          %p271 = pneg %p83
        $region38: #{tpu_custom_call.1} parent=31 // pred_check_branch
          %273 = sbr.rel (%p271) target = $region40
        $region39: #{tpu_custom_call.1} parent=31 // pred_region
          %274 = dma.done [#allocation6], 12288
        $region40: #{tpu_custom_call.1} parent=31 // pred_fallthru
          _
        // Predicated region
        $region41: #{tpu_custom_call.1} parent=31 // pred_check
          %p275 = pneg %p104
        $region42: #{tpu_custom_call.1} parent=31 // pred_check_branch
          %277 = sbr.rel (%p275) target = $region44
        $region43: #{tpu_custom_call.1} parent=31 // pred_region
          %278 = dma.done [#allocation6], 96
        $region44: #{tpu_custom_call.1} parent=31 // pred_fallthru
          _
        %s279 = sand.u32 %s49, 1
        %s280 = scalar_lea.sflag [#allocation3], %s279
        %s281 = sand.u32 %s49, 1
        %s282 = smul.addr %s281, 512
        %s283 = scalar_lea.vmem [#allocation2], %s282
        %p284 = pneg %p62
        %p285 = pneg %p59
        %p286 = pneg %p83
        %p287 = pneg %p80
        %p288 = pneg %p104
        %p289 = pneg %p101
        %p290 = pneg %p132
        %p291 = pneg %p129
        %s292 = sand.u32 %s119, 1
        %s293 = scalar_lea.sflag [#allocation4], %s292
        %s294 = sand.u32 %s119, 1
        %s295 = smul.addr %s294, 256
        %s296 = scalar_lea.vmem [#allocation8], %s295
        %p297 = pneg %p160
        %p298 = pneg %p157
        %s299 = sand.u32 %s27, 1
        %s300 = scalar_lea.sflag [#allocation10], %s299
        %s301 = sand.u32 %s147, 1
        %s302 = smul.addr %s301, 256
        %s303 = scalar_lea.vmem [#allocation9], %s302
        %p304 = pneg %p188
        %p305 = pneg %p185
        %s306 = sand.u32 %s27, 1
        %s307 = scalar_lea.sflag [#allocation10], %s306
        %s308 = sand.u32 %s175, 1
        %s309 = smul.addr %s308, 256
        %s310 = scalar_lea.vmem [#allocation11], %s309
        %s311 = smul.u32 32, %s32
        %s312 = smul.u32 32, %s32
        %s313 = smul.u32 32, %s32
        %s314 = smul.u32 32, %s32
        %v315 = vld [vmem:[%s266] sm:$0xff]
        %v316 = vld [vmem:[%s266 + $0x8] sm:$0xff]
        %v317 = vld [vmem:[%s266 + $0x10] sm:$0xff]
        %v318 = vld [vmem:[%s266 + $0x18] sm:$0xff]
        %v319 = vld [vmem:[%s266 + $0x20] sm:$0xff]
        %v320 = vld [vmem:[%s266 + $0x28] sm:$0xff]
        %v321 = vld [vmem:[%s266 + $0x30] sm:$0xff]
        %v322 = vld [vmem:[%s266 + $0x38] sm:$0xff]
        %v323 = vld [vmem:[%s266 + $0x40] sm:$0xff]
        %v324 = vld [vmem:[%s266 + $0x48] sm:$0xff]
        %v325 = vld [vmem:[%s266 + $0x50] sm:$0xff]
        %v326 = vld [vmem:[%s266 + $0x58] sm:$0xff]
        %v327 = vld [vmem:[%s266 + $0x60] sm:$0xff]
        %v328 = vld [vmem:[%s266 + $0x68] sm:$0xff]
        %v329 = vld [vmem:[%s266 + $0x70] sm:$0xff]
        %v330 = vld [vmem:[%s266 + $0x78] sm:$0xff]
        %v331 = vld [vmem:[%s266 + $0x80] sm:$0xff]
        %v332 = vld [vmem:[%s266 + $0x88] sm:$0xff]
        %v333 = vld [vmem:[%s266 + $0x90] sm:$0xff]
        %v334 = vld [vmem:[%s266 + $0x98] sm:$0xff]
        %v335 = vld [vmem:[%s266 + $0xa0] sm:$0xff]
        %v336 = vld [vmem:[%s266 + $0xa8] sm:$0xff]
        %v337 = vld [vmem:[%s266 + $0xb0] sm:$0xff]
        %v338 = vld [vmem:[%s266 + $0xb8] sm:$0xff]
        %v339 = vld [vmem:[%s266 + $0xc0] sm:$0xff]
        %v340 = vld [vmem:[%s266 + $0xc8] sm:$0xff]
        %v341 = vld [vmem:[%s266 + $0xd0] sm:$0xff]
        %v342 = vld [vmem:[%s266 + $0xd8] sm:$0xff]
        %v343 = vld [vmem:[%s266 + $0xe0] sm:$0xff]
        %v344 = vld [vmem:[%s266 + $0xe8] sm:$0xff]
        %v345 = vld [vmem:[%s266 + $0xf0] sm:$0xff]
        %v346 = vld [vmem:[%s266 + $0xf8] sm:$0xff]
        %v347 = vld [vmem:[%s266 + $0x100] sm:$0xff]
        %v348 = vld [vmem:[%s266 + $0x108] sm:$0xff]
        %v349 = vld [vmem:[%s266 + $0x110] sm:$0xff]
        %v350 = vld [vmem:[%s266 + $0x118] sm:$0xff]
        %v351 = vld [vmem:[%s266 + $0x120] sm:$0xff]
        %v352 = vld [vmem:[%s266 + $0x128] sm:$0xff]
        %v353 = vld [vmem:[%s266 + $0x130] sm:$0xff]
        %v354 = vld [vmem:[%s266 + $0x138] sm:$0xff]
        %v355 = vld [vmem:[%s266 + $0x140] sm:$0xff]
        %v356 = vld [vmem:[%s266 + $0x148] sm:$0xff]
        %v357 = vld [vmem:[%s266 + $0x150] sm:$0xff]
        %v358 = vld [vmem:[%s266 + $0x158] sm:$0xff]
        %v359 = vld [vmem:[%s266 + $0x160] sm:$0xff]
        %v360 = vld [vmem:[%s266 + $0x168] sm:$0xff]
        %v361 = vld [vmem:[%s266 + $0x170] sm:$0xff]
        %v362 = vld [vmem:[%s266 + $0x178] sm:$0xff]
        %v363 = vld [vmem:[%s266 + $0x180] sm:$0xff]
        %v364 = vld [vmem:[%s266 + $0x188] sm:$0xff]
        %v365 = vld [vmem:[%s266 + $0x190] sm:$0xff]
        %v366 = vld [vmem:[%s266 + $0x198] sm:$0xff]
        %v367 = vld [vmem:[%s266 + $0x1a0] sm:$0xff]
        %v368 = vld [vmem:[%s266 + $0x1a8] sm:$0xff]
        %v369 = vld [vmem:[%s266 + $0x1b0] sm:$0xff]
        %v370 = vld [vmem:[%s266 + $0x1b8] sm:$0xff]
        %v371 = vld [vmem:[%s266 + $0x1c0] sm:$0xff]
        %v372 = vld [vmem:[%s266 + $0x1c8] sm:$0xff]
        %v373 = vld [vmem:[%s266 + $0x1d0] sm:$0xff]
        %v374 = vld [vmem:[%s266 + $0x1d8] sm:$0xff]
        %v375 = vld [vmem:[%s266 + $0x1e0] sm:$0xff]
        %v376 = vld [vmem:[%s266 + $0x1e8] sm:$0xff]
        %v377 = vld [vmem:[%s266 + $0x1f0] sm:$0xff]
        %v378 = vld [vmem:[%s266 + $0x1f8] sm:$0xff]
        %v379 = vmul.f32 %v315, %v315
        %v380 = vmul.f32 %v316, %v316
        %v381 = vmul.f32 %v317, %v317
        %v382 = vmul.f32 %v318, %v318
        %v383 = vmul.f32 %v319, %v319
        %v384 = vmul.f32 %v320, %v320
        %v385 = vmul.f32 %v321, %v321
        %v386 = vmul.f32 %v322, %v322
        %v387 = vmul.f32 %v323, %v323
        %v388 = vmul.f32 %v324, %v324
        %v389 = vmul.f32 %v325, %v325
        %v390 = vmul.f32 %v326, %v326
        %v391 = vmul.f32 %v327, %v327
        %v392 = vmul.f32 %v328, %v328
        %v393 = vmul.f32 %v329, %v329
        %v394 = vmul.f32 %v330, %v330
        %v395 = vmul.f32 %v331, %v331
        %v396 = vmul.f32 %v332, %v332
        %v397 = vmul.f32 %v333, %v333
        %v398 = vmul.f32 %v334, %v334
        %v399 = vmul.f32 %v335, %v335
        %v400 = vmul.f32 %v336, %v336
        %v401 = vmul.f32 %v337, %v337
        %v402 = vmul.f32 %v338, %v338
        %v403 = vmul.f32 %v339, %v339
        %v404 = vmul.f32 %v340, %v340
        %v405 = vmul.f32 %v341, %v341
        %v406 = vmul.f32 %v342, %v342
        %v407 = vmul.f32 %v343, %v343
        %v408 = vmul.f32 %v344, %v344
        %v409 = vmul.f32 %v345, %v345
        %v410 = vmul.f32 %v346, %v346
        %v411 = vmul.f32 %v347, %v347
        %v412 = vmul.f32 %v348, %v348
        %v413 = vmul.f32 %v349, %v349
        %v414 = vmul.f32 %v350, %v350
        %v415 = vmul.f32 %v351, %v351
        %v416 = vmul.f32 %v352, %v352
        %v417 = vmul.f32 %v353, %v353
        %v418 = vmul.f32 %v354, %v354
        %v419 = vmul.f32 %v355, %v355
        %v420 = vmul.f32 %v356, %v356
        %v421 = vmul.f32 %v357, %v357
        %v422 = vmul.f32 %v358, %v358
        %v423 = vmul.f32 %v359, %v359
        %v424 = vmul.f32 %v360, %v360
        %v425 = vmul.f32 %v361, %v361
        %v426 = vmul.f32 %v362, %v362
        %v427 = vmul.f32 %v363, %v363
        %v428 = vmul.f32 %v364, %v364
        %v429 = vmul.f32 %v365, %v365
        %v430 = vmul.f32 %v366, %v366
        %v431 = vmul.f32 %v367, %v367
        %v432 = vmul.f32 %v368, %v368
        %v433 = vmul.f32 %v369, %v369
        %v434 = vmul.f32 %v370, %v370
        %v435 = vmul.f32 %v371, %v371
        %v436 = vmul.f32 %v372, %v372
        %v437 = vmul.f32 %v373, %v373
        %v438 = vmul.f32 %v374, %v374
        %v439 = vmul.f32 %v375, %v375
        %v440 = vmul.f32 %v376, %v376
        %v441 = vmul.f32 %v377, %v377
        %v442 = vmul.f32 %v378, %v378
        %v443 = vadd.f32 %v379, %v380
        %444 = vadd.xlane.f32.xlu0 %v443
        %v445 = vpop.xlane.xlu0 %444
        %v446 = vadd.f32 %v381, %v382
        %447 = vadd.xlane.f32.xlu0 %v446
        %v448 = vpop.xlane.xlu0 %447
        %v449 = vadd.f32 %v383, %v384
        %450 = vadd.xlane.f32.xlu0 %v449
        %v451 = vpop.xlane.xlu0 %450
        %v452 = vadd.f32 %v385, %v386
        %453 = vadd.xlane.f32.xlu0 %v452
        %v454 = vpop.xlane.xlu0 %453
        %v455 = vadd.f32 %v387, %v388
        %456 = vadd.xlane.f32.xlu0 %v455
        %v457 = vpop.xlane.xlu0 %456
        %v458 = vadd.f32 %v389, %v390
        %459 = vadd.xlane.f32.xlu0 %v458
        %v460 = vpop.xlane.xlu0 %459
        %v461 = vadd.f32 %v391, %v392
        %462 = vadd.xlane.f32.xlu0 %v461
        %v463 = vpop.xlane.xlu0 %462
        %v464 = vadd.f32 %v393, %v394
        %465 = vadd.xlane.f32.xlu0 %v464
        %v466 = vpop.xlane.xlu0 %465
        %v467 = vadd.f32 %v395, %v396
        %468 = vadd.xlane.f32.xlu0 %v467
        %v469 = vpop.xlane.xlu0 %468
        %v470 = vadd.f32 %v397, %v398
        %471 = vadd.xlane.f32.xlu0 %v470
        %v472 = vpop.xlane.xlu0 %471
        %v473 = vadd.f32 %v399, %v400
        %474 = vadd.xlane.f32.xlu0 %v473
        %v475 = vpop.xlane.xlu0 %474
        %v476 = vadd.f32 %v401, %v402
        %477 = vadd.xlane.f32.xlu0 %v476
        %v478 = vpop.xlane.xlu0 %477
        %v479 = vadd.f32 %v403, %v404
        %480 = vadd.xlane.f32.xlu0 %v479
        %v481 = vpop.xlane.xlu0 %480
        %v482 = vadd.f32 %v405, %v406
        %483 = vadd.xlane.f32.xlu0 %v482
        %v484 = vpop.xlane.xlu0 %483
        %v485 = vadd.f32 %v407, %v408
        %486 = vadd.xlane.f32.xlu0 %v485
        %v487 = vpop.xlane.xlu0 %486
        %v488 = vadd.f32 %v409, %v410
        %489 = vadd.xlane.f32.xlu0 %v488
        %v490 = vpop.xlane.xlu0 %489
        %v491 = vadd.f32 %v411, %v412
        %492 = vadd.xlane.f32.xlu0 %v491
        %v493 = vpop.xlane.xlu0 %492
        %v494 = vadd.f32 %v413, %v414
        %495 = vadd.xlane.f32.xlu0 %v494
        %v496 = vpop.xlane.xlu0 %495
        %v497 = vadd.f32 %v415, %v416
        %498 = vadd.xlane.f32.xlu0 %v497
        %v499 = vpop.xlane.xlu0 %498
        %v500 = vadd.f32 %v417, %v418
        %501 = vadd.xlane.f32.xlu0 %v500
        %v502 = vpop.xlane.xlu0 %501
        %v503 = vadd.f32 %v419, %v420
        %504 = vadd.xlane.f32.xlu0 %v503
        %v505 = vpop.xlane.xlu0 %504
        %v506 = vadd.f32 %v421, %v422
        %507 = vadd.xlane.f32.xlu0 %v506
        %v508 = vpop.xlane.xlu0 %507
        %v509 = vadd.f32 %v423, %v424
        %510 = vadd.xlane.f32.xlu0 %v509
        %v511 = vpop.xlane.xlu0 %510
        %v512 = vadd.f32 %v425, %v426
        %513 = vadd.xlane.f32.xlu0 %v512
        %v514 = vpop.xlane.xlu0 %513
        %v515 = vadd.f32 %v427, %v428
        %516 = vadd.xlane.f32.xlu0 %v515
        %v517 = vpop.xlane.xlu0 %516
        %v518 = vadd.f32 %v429, %v430
        %519 = vadd.xlane.f32.xlu0 %v518
        %v520 = vpop.xlane.xlu0 %519
        %v521 = vadd.f32 %v431, %v432
        %522 = vadd.xlane.f32.xlu0 %v521
        %v523 = vpop.xlane.xlu0 %522
        %v524 = vadd.f32 %v433, %v434
        %525 = vadd.xlane.f32.xlu0 %v524
        %v526 = vpop.xlane.xlu0 %525
        %v527 = vadd.f32 %v435, %v436
        %528 = vadd.xlane.f32.xlu0 %v527
        %v529 = vpop.xlane.xlu0 %528
        %v530 = vadd.f32 %v437, %v438
        %531 = vadd.xlane.f32.xlu0 %v530
        %v532 = vpop.xlane.xlu0 %531
        %v533 = vadd.f32 %v439, %v440
        %534 = vadd.xlane.f32.xlu0 %v533
        %v535 = vpop.xlane.xlu0 %534
        %v536 = vadd.f32 %v441, %v442
        %537 = vadd.xlane.f32.xlu0 %v536
        %v538 = vpop.xlane.xlu0 %537
        %v539 = vrcp.pop 256.0
        %v540 = vmul.f32 %v445, %v539
        %v541 = vmul.f32 %v448, %v539
        %v542 = vmul.f32 %v451, %v539
        %v543 = vmul.f32 %v454, %v539
        %v544 = vmul.f32 %v457, %v539
        %v545 = vmul.f32 %v460, %v539
        %v546 = vmul.f32 %v463, %v539
        %v547 = vmul.f32 %v466, %v539
        %v548 = vmul.f32 %v469, %v539
        %v549 = vmul.f32 %v472, %v539
        %v550 = vmul.f32 %v475, %v539
        %v551 = vmul.f32 %v478, %v539
        %v552 = vmul.f32 %v481, %v539
        %v553 = vmul.f32 %v484, %v539
        %v554 = vmul.f32 %v487, %v539
        %v555 = vmul.f32 %v490, %v539
        %v556 = vmul.f32 %v493, %v539
        %v557 = vmul.f32 %v496, %v539
        %v558 = vmul.f32 %v499, %v539
        %v559 = vmul.f32 %v502, %v539
        %v560 = vmul.f32 %v505, %v539
        %v561 = vmul.f32 %v508, %v539
        %v562 = vmul.f32 %v511, %v539
        %v563 = vmul.f32 %v514, %v539
        %v564 = vmul.f32 %v517, %v539
        %v565 = vmul.f32 %v520, %v539
        %v566 = vmul.f32 %v523, %v539
        %v567 = vmul.f32 %v526, %v539
        %v568 = vmul.f32 %v529, %v539
        %v569 = vmul.f32 %v532, %v539
        %v570 = vmul.f32 %v535, %v539
        %v571 = vmul.f32 %v538, %v539
        %v572 = vadd.f32 %v540, 1e-05
        %v573 = vadd.f32 %v541, 1e-05
        %v574 = vadd.f32 %v542, 1e-05
        %v575 = vadd.f32 %v543, 1e-05
        %v576 = vadd.f32 %v544, 1e-05
        %v577 = vadd.f32 %v545, 1e-05
        %v578 = vadd.f32 %v546, 1e-05
        %v579 = vadd.f32 %v547, 1e-05
        %v580 = vadd.f32 %v548, 1e-05
        %v581 = vadd.f32 %v549, 1e-05
        %v582 = vadd.f32 %v550, 1e-05
        %v583 = vadd.f32 %v551, 1e-05
        %v584 = vadd.f32 %v552, 1e-05
        %v585 = vadd.f32 %v553, 1e-05
        %v586 = vadd.f32 %v554, 1e-05
        %v587 = vadd.f32 %v555, 1e-05
        %v588 = vadd.f32 %v556, 1e-05
        %v589 = vadd.f32 %v557, 1e-05
        %v590 = vadd.f32 %v558, 1e-05
        %v591 = vadd.f32 %v559, 1e-05
        %v592 = vadd.f32 %v560, 1e-05
        %v593 = vadd.f32 %v561, 1e-05
        %v594 = vadd.f32 %v562, 1e-05
        %v595 = vadd.f32 %v563, 1e-05
        %v596 = vadd.f32 %v564, 1e-05
        %v597 = vadd.f32 %v565, 1e-05
        %v598 = vadd.f32 %v566, 1e-05
        %v599 = vadd.f32 %v567, 1e-05
        %v600 = vadd.f32 %v568, 1e-05
        %v601 = vadd.f32 %v569, 1e-05
        %v602 = vadd.f32 %v570, 1e-05
        %v603 = vadd.f32 %v571, 1e-05
        %v604 = vrsqrt.pop %v572
        %v605 = vrsqrt.pop %v573
        %v606 = vrsqrt.pop %v574
        %v607 = vrsqrt.pop %v575
        %v608 = vrsqrt.pop %v576
        %v609 = vrsqrt.pop %v577
        %v610 = vrsqrt.pop %v578
        %v611 = vrsqrt.pop %v579
        %v612 = vrsqrt.pop %v580
        %v613 = vrsqrt.pop %v581
        %v614 = vrsqrt.pop %v582
        %v615 = vrsqrt.pop %v583
        %v616 = vrsqrt.pop %v584
        %v617 = vrsqrt.pop %v585
        %v618 = vrsqrt.pop %v586
        %v619 = vrsqrt.pop %v587
        %v620 = vrsqrt.pop %v588
        %v621 = vrsqrt.pop %v589
        %v622 = vrsqrt.pop %v590
        %v623 = vrsqrt.pop %v591
        %v624 = vrsqrt.pop %v592
        %v625 = vrsqrt.pop %v593
        %v626 = vrsqrt.pop %v594
        %v627 = vrsqrt.pop %v595
        %v628 = vrsqrt.pop %v596
        %v629 = vrsqrt.pop %v597
        %v630 = vrsqrt.pop %v598
        %v631 = vrsqrt.pop %v599
        %v632 = vrsqrt.pop %v600
        %v633 = vrsqrt.pop %v601
        %v634 = vrsqrt.pop %v602
        %v635 = vrsqrt.pop %v603
        %v636 = vmul.f32 %v315, %v604
        %v637 = vmul.f32 %v316, %v604
        %v638 = vmul.f32 %v317, %v605
        %v639 = vmul.f32 %v318, %v605
        %v640 = vmul.f32 %v319, %v606
        %v641 = vmul.f32 %v320, %v606
        %v642 = vmul.f32 %v321, %v607
        %v643 = vmul.f32 %v322, %v607
        %v644 = vmul.f32 %v323, %v608
        %v645 = vmul.f32 %v324, %v608
        %v646 = vmul.f32 %v325, %v609
        %v647 = vmul.f32 %v326, %v609
        %v648 = vmul.f32 %v327, %v610
        %v649 = vmul.f32 %v328, %v610
        %v650 = vmul.f32 %v329, %v611
        %v651 = vmul.f32 %v330, %v611
        %v652 = vmul.f32 %v331, %v612
        %v653 = vmul.f32 %v332, %v612
        %v654 = vmul.f32 %v333, %v613
        %v655 = vmul.f32 %v334, %v613
        %v656 = vmul.f32 %v335, %v614
        %v657 = vmul.f32 %v336, %v614
        %v658 = vmul.f32 %v337, %v615
        %v659 = vmul.f32 %v338, %v615
        %v660 = vmul.f32 %v339, %v616
        %v661 = vmul.f32 %v340, %v616
        %v662 = vmul.f32 %v341, %v617
        %v663 = vmul.f32 %v342, %v617
        %v664 = vmul.f32 %v343, %v618
        %v665 = vmul.f32 %v344, %v618
        %v666 = vmul.f32 %v345, %v619
        %v667 = vmul.f32 %v346, %v619
        %v668 = vmul.f32 %v347, %v620
        %v669 = vmul.f32 %v348, %v620
        %v670 = vmul.f32 %v349, %v621
        %v671 = vmul.f32 %v350, %v621
        %v672 = vmul.f32 %v351, %v622
        %v673 = vmul.f32 %v352, %v622
        %v674 = vmul.f32 %v353, %v623
        %v675 = vmul.f32 %v354, %v623
        %v676 = vmul.f32 %v355, %v624
        %v677 = vmul.f32 %v356, %v624
        %v678 = vmul.f32 %v357, %v625
        %v679 = vmul.f32 %v358, %v625
        %v680 = vmul.f32 %v359, %v626
        %v681 = vmul.f32 %v360, %v626
        %v682 = vmul.f32 %v361, %v627
        %v683 = vmul.f32 %v362, %v627
        %v684 = vmul.f32 %v363, %v628
        %v685 = vmul.f32 %v364, %v628
        %v686 = vmul.f32 %v365, %v629
        %v687 = vmul.f32 %v366, %v629
        %v688 = vmul.f32 %v367, %v630
        %v689 = vmul.f32 %v368, %v630
        %v690 = vmul.f32 %v369, %v631
        %v691 = vmul.f32 %v370, %v631
        %v692 = vmul.f32 %v371, %v632
        %v693 = vmul.f32 %v372, %v632
        %v694 = vmul.f32 %v373, %v633
        %v695 = vmul.f32 %v374, %v633
        %v696 = vmul.f32 %v375, %v634
        %v697 = vmul.f32 %v376, %v634
        %v698 = vmul.f32 %v377, %v635
        %v699 = vmul.f32 %v378, %v635
        %v700 = vpack.c.bf16 %v638, %v636
        %v701 = vpack.c.bf16 %v639, %v637
        %v702 = vpack.c.bf16 %v642, %v640
        %v703 = vpack.c.bf16 %v643, %v641
        %v704 = vpack.c.bf16 %v646, %v644
        %v705 = vpack.c.bf16 %v647, %v645
        %v706 = vpack.c.bf16 %v650, %v648
        %v707 = vpack.c.bf16 %v651, %v649
        %v708 = vpack.c.bf16 %v654, %v652
        %v709 = vpack.c.bf16 %v655, %v653
        %v710 = vpack.c.bf16 %v658, %v656
        %v711 = vpack.c.bf16 %v659, %v657
        %v712 = vpack.c.bf16 %v662, %v660
        %v713 = vpack.c.bf16 %v663, %v661
        %v714 = vpack.c.bf16 %v666, %v664
        %v715 = vpack.c.bf16 %v667, %v665
        %v716 = vpack.c.bf16 %v670, %v668
        %v717 = vpack.c.bf16 %v671, %v669
        %v718 = vpack.c.bf16 %v674, %v672
        %v719 = vpack.c.bf16 %v675, %v673
        %v720 = vpack.c.bf16 %v678, %v676
        %v721 = vpack.c.bf16 %v679, %v677
        %v722 = vpack.c.bf16 %v682, %v680
        %v723 = vpack.c.bf16 %v683, %v681
        %v724 = vpack.c.bf16 %v686, %v684
        %v725 = vpack.c.bf16 %v687, %v685
        %v726 = vpack.c.bf16 %v690, %v688
        %v727 = vpack.c.bf16 %v691, %v689
        %v728 = vpack.c.bf16 %v694, %v692
        %v729 = vpack.c.bf16 %v695, %v693
        %v730 = vpack.c.bf16 %v698, %v696
        %v731 = vpack.c.bf16 %v699, %v697
        %v732 = vld [vmem:[#allocation5] sm:$0xff]
        %v733 = vld [vmem:[#allocation5 + $0x8] sm:$0xff]
        %v734 = vld [vmem:[#allocation5 + $0x10] sm:$0xff]
        %v735 = vld [vmem:[#allocation5 + $0x18] sm:$0xff]
        %v736 = vld [vmem:[#allocation5 + $0x20] sm:$0xff]
        %v737 = vld [vmem:[#allocation5 + $0x28] sm:$0xff]
        %v738 = vld [vmem:[#allocation5 + $0x30] sm:$0xff]
        %v739 = vld [vmem:[#allocation5 + $0x38] sm:$0xff]
        %v740 = vld [vmem:[#allocation5 + $0x40] sm:$0xff]
        %v741 = vld [vmem:[#allocation5 + $0x48] sm:$0xff]
        %v742 = vld [vmem:[#allocation5 + $0x50] sm:$0xff]
        %v743 = vld [vmem:[#allocation5 + $0x58] sm:$0xff]
        %v744 = vld [vmem:[#allocation5 + $0x60] sm:$0xff]
        %v745 = vld [vmem:[#allocation5 + $0x68] sm:$0xff]
        %v746 = vld [vmem:[#allocation5 + $0x70] sm:$0xff]
        %v747 = vld [vmem:[#allocation5 + $0x78] sm:$0xff]
        %v748 = vld [vmem:[#allocation5 + $0x80] sm:$0xff]
        %v749 = vld [vmem:[#allocation5 + $0x88] sm:$0xff]
        %v750 = vld [vmem:[#allocation5 + $0x90] sm:$0xff]
        %v751 = vld [vmem:[#allocation5 + $0x98] sm:$0xff]
        %v752 = vld [vmem:[#allocation5 + $0xa0] sm:$0xff]
        %v753 = vld [vmem:[#allocation5 + $0xa8] sm:$0xff]
        %v754 = vld [vmem:[#allocation5 + $0xb0] sm:$0xff]
        %v755 = vld [vmem:[#allocation5 + $0xb8] sm:$0xff]
        %v756 = vld [vmem:[#allocation5 + $0xc0] sm:$0xff]
        %v757 = vld [vmem:[#allocation5 + $0xc8] sm:$0xff]
        %v758 = vld [vmem:[#allocation5 + $0xd0] sm:$0xff]
        %v759 = vld [vmem:[#allocation5 + $0xd8] sm:$0xff]
        %v760 = vld [vmem:[#allocation5 + $0xe0] sm:$0xff]
        %v761 = vld [vmem:[#allocation5 + $0xe8] sm:$0xff]
        %v762 = vld [vmem:[#allocation5 + $0xf0] sm:$0xff]
        %v763 = vld [vmem:[#allocation5 + $0xf8] sm:$0xff]
        %v764 = vld [vmem:[#allocation5 + $0x100] sm:$0xff]
        %v765 = vld [vmem:[#allocation5 + $0x108] sm:$0xff]
        %v766 = vld [vmem:[#allocation5 + $0x110] sm:$0xff]
        %v767 = vld [vmem:[#allocation5 + $0x118] sm:$0xff]
        %v768 = vld [vmem:[#allocation5 + $0x120] sm:$0xff]
        %v769 = vld [vmem:[#allocation5 + $0x128] sm:$0xff]
        %v770 = vld [vmem:[#allocation5 + $0x130] sm:$0xff]
        %v771 = vld [vmem:[#allocation5 + $0x138] sm:$0xff]
        %v772 = vld [vmem:[#allocation5 + $0x140] sm:$0xff]
        %v773 = vld [vmem:[#allocation5 + $0x148] sm:$0xff]
        %v774 = vld [vmem:[#allocation5 + $0x150] sm:$0xff]
        %v775 = vld [vmem:[#allocation5 + $0x158] sm:$0xff]
        %v776 = vld [vmem:[#allocation5 + $0x160] sm:$0xff]
        %v777 = vld [vmem:[#allocation5 + $0x168] sm:$0xff]
        %v778 = vld [vmem:[#allocation5 + $0x170] sm:$0xff]
        %v779 = vld [vmem:[#allocation5 + $0x178] sm:$0xff]
        %v780 = vld [vmem:[#allocation5 + $0x180] sm:$0xff]
        %v781 = vld [vmem:[#allocation5 + $0x188] sm:$0xff]
        %v782 = vld [vmem:[#allocation5 + $0x190] sm:$0xff]
        %v783 = vld [vmem:[#allocation5 + $0x198] sm:$0xff]
        %v784 = vld [vmem:[#allocation5 + $0x1a0] sm:$0xff]
        %v785 = vld [vmem:[#allocation5 + $0x1a8] sm:$0xff]
        %v786 = vld [vmem:[#allocation5 + $0x1b0] sm:$0xff]
        %v787 = vld [vmem:[#allocation5 + $0x1b8] sm:$0xff]
        %v788 = vld [vmem:[#allocation5 + $0x1c0] sm:$0xff]
        %v789 = vld [vmem:[#allocation5 + $0x1c8] sm:$0xff]
        %v790 = vld [vmem:[#allocation5 + $0x1d0] sm:$0xff]
        %v791 = vld [vmem:[#allocation5 + $0x1d8] sm:$0xff]
        %v792 = vld [vmem:[#allocation5 + $0x1e0] sm:$0xff]
        %v793 = vld [vmem:[#allocation5 + $0x1e8] sm:$0xff]
        %v794 = vld [vmem:[#allocation5 + $0x1f0] sm:$0xff]
        %v795 = vld [vmem:[#allocation5 + $0x1f8] sm:$0xff]
        %v796 = vld [vmem:[#allocation5 + $0x200] sm:$0xff]
        %v797 = vld [vmem:[#allocation5 + $0x208] sm:$0xff]
        %v798 = vld [vmem:[#allocation5 + $0x210] sm:$0xff]
        %v799 = vld [vmem:[#allocation5 + $0x218] sm:$0xff]
        %v800 = vld [vmem:[#allocation5 + $0x220] sm:$0xff]
        %v801 = vld [vmem:[#allocation5 + $0x228] sm:$0xff]
        %v802 = vld [vmem:[#allocation5 + $0x230] sm:$0xff]
        %v803 = vld [vmem:[#allocation5 + $0x238] sm:$0xff]
        %v804 = vld [vmem:[#allocation5 + $0x240] sm:$0xff]
        %v805 = vld [vmem:[#allocation5 + $0x248] sm:$0xff]
        %v806 = vld [vmem:[#allocation5 + $0x250] sm:$0xff]
        %v807 = vld [vmem:[#allocation5 + $0x258] sm:$0xff]
        %v808 = vld [vmem:[#allocation5 + $0x260] sm:$0xff]
        %v809 = vld [vmem:[#allocation5 + $0x268] sm:$0xff]
        %v810 = vld [vmem:[#allocation5 + $0x270] sm:$0xff]
        %v811 = vld [vmem:[#allocation5 + $0x278] sm:$0xff]
        %v812 = vld [vmem:[#allocation5 + $0x280] sm:$0xff]
        %v813 = vld [vmem:[#allocation5 + $0x288] sm:$0xff]
        %v814 = vld [vmem:[#allocation5 + $0x290] sm:$0xff]
        %v815 = vld [vmem:[#allocation5 + $0x298] sm:$0xff]
        %v816 = vld [vmem:[#allocation5 + $0x2a0] sm:$0xff]
        %v817 = vld [vmem:[#allocation5 + $0x2a8] sm:$0xff]
        %v818 = vld [vmem:[#allocation5 + $0x2b0] sm:$0xff]
        %v819 = vld [vmem:[#allocation5 + $0x2b8] sm:$0xff]
        %v820 = vld [vmem:[#allocation5 + $0x2c0] sm:$0xff]
        %v821 = vld [vmem:[#allocation5 + $0x2c8] sm:$0xff]
        %v822 = vld [vmem:[#allocation5 + $0x2d0] sm:$0xff]
        %v823 = vld [vmem:[#allocation5 + $0x2d8] sm:$0xff]
        %v824 = vld [vmem:[#allocation5 + $0x2e0] sm:$0xff]
        %v825 = vld [vmem:[#allocation5 + $0x2e8] sm:$0xff]
        %v826 = vld [vmem:[#allocation5 + $0x2f0] sm:$0xff]
        %v827 = vld [vmem:[#allocation5 + $0x2f8] sm:$0xff]
        %v828 = vld [vmem:[#allocation7] sm:$0x3f]
        %v830 = vlaneseq
        %v831 = vshrl.u32 %v830, 7
        %v832 = vsub.s32 0, %v831
        %v833 = vrot.slane %v828, %v832
        %v834 = vlaneseq
        %v835 = vshrl.u32 %v834, 7
        %v836 = vsub.s32 1, %v835
        %v837 = vrot.slane %v828, %v836
        %v838 = vlaneseq
        %v839 = vshrl.u32 %v838, 7
        %v840 = vsub.s32 2, %v839
        %v841 = vrot.slane %v828, %v840
        %v842 = vlaneseq
        %v843 = vshrl.u32 %v842, 7
        %v844 = vsub.s32 3, %v843
        %v845 = vrot.slane %v828, %v844
        %v846 = vlaneseq
        %v847 = vshrl.u32 %v846, 7
        %v848 = vsub.s32 4, %v847
        %v849 = vrot.slane %v828, %v848
        %v850 = vlaneseq
        %v851 = vshrl.u32 %v850, 7
        %v852 = vsub.s32 5, %v851
        %v853 = vrot.slane %v828, %v852
        %v956 = vunpack.c.l.b16 %v732
        %v957 = vunpack.c.h.b16 %v732
        %v958 = vunpack.c.l.b16 %v733
        %v959 = vunpack.c.h.b16 %v733
        %v960 = vunpack.c.l.b16 %v734
        %v961 = vunpack.c.h.b16 %v734
        %v962 = vunpack.c.l.b16 %v735
        %v963 = vunpack.c.h.b16 %v735
        %v964 = vunpack.c.l.b16 %v736
        %v965 = vunpack.c.h.b16 %v736
        %v966 = vunpack.c.l.b16 %v737
        %v967 = vunpack.c.h.b16 %v737
        %v968 = vunpack.c.l.b16 %v738
        %v969 = vunpack.c.h.b16 %v738
        %v970 = vunpack.c.l.b16 %v739
        %v971 = vunpack.c.h.b16 %v739
        %v972 = vunpack.c.l.b16 %v740
        %v973 = vunpack.c.h.b16 %v740
        %v974 = vunpack.c.l.b16 %v741
        %v975 = vunpack.c.h.b16 %v741
        %v976 = vunpack.c.l.b16 %v742
        %v977 = vunpack.c.h.b16 %v742
        %v978 = vunpack.c.l.b16 %v743
        %v979 = vunpack.c.h.b16 %v743
        %v980 = vunpack.c.l.b16 %v744
        %v981 = vunpack.c.h.b16 %v744
        %v982 = vunpack.c.l.b16 %v745
        %v983 = vunpack.c.h.b16 %v745
        %v984 = vunpack.c.l.b16 %v746
        %v985 = vunpack.c.h.b16 %v746
        %v986 = vunpack.c.l.b16 %v747
        %v987 = vunpack.c.h.b16 %v747
        %v988 = vunpack.c.l.b16 %v748
        %v989 = vunpack.c.h.b16 %v748
        %v990 = vunpack.c.l.b16 %v749
        %v991 = vunpack.c.h.b16 %v749
        %v992 = vunpack.c.l.b16 %v750
        %v993 = vunpack.c.h.b16 %v750
        %v994 = vunpack.c.l.b16 %v751
        %v995 = vunpack.c.h.b16 %v751
        %v996 = vunpack.c.l.b16 %v752
        %v997 = vunpack.c.h.b16 %v752
        %v998 = vunpack.c.l.b16 %v753
        %v999 = vunpack.c.h.b16 %v753
        %v1000 = vunpack.c.l.b16 %v754
        %v1001 = vunpack.c.h.b16 %v754
        %v1002 = vunpack.c.l.b16 %v755
        %v1003 = vunpack.c.h.b16 %v755
        %v1004 = vunpack.c.l.b16 %v756
        %v1005 = vunpack.c.h.b16 %v756
        %v1006 = vunpack.c.l.b16 %v757
        %v1007 = vunpack.c.h.b16 %v757
        %v1008 = vunpack.c.l.b16 %v758
        %v1009 = vunpack.c.h.b16 %v758
        %v1010 = vunpack.c.l.b16 %v759
        %v1011 = vunpack.c.h.b16 %v759
        %v1012 = vunpack.c.l.b16 %v760
        %v1013 = vunpack.c.h.b16 %v760
        %v1014 = vunpack.c.l.b16 %v761
        %v1015 = vunpack.c.h.b16 %v761
        %v1016 = vunpack.c.l.b16 %v762
        %v1017 = vunpack.c.h.b16 %v762
        %v1018 = vunpack.c.l.b16 %v763
        %v1019 = vunpack.c.h.b16 %v763
        %v1020 = vunpack.c.l.b16 %v764
        %v1021 = vunpack.c.h.b16 %v764
        %v1022 = vunpack.c.l.b16 %v765
        %v1023 = vunpack.c.h.b16 %v765
        %v1024 = vunpack.c.l.b16 %v766
        %v1025 = vunpack.c.h.b16 %v766
        %v1026 = vunpack.c.l.b16 %v767
        %v1027 = vunpack.c.h.b16 %v767
        %v1028 = vunpack.c.l.b16 %v768
        %v1029 = vunpack.c.h.b16 %v768
        %v1030 = vunpack.c.l.b16 %v769
        %v1031 = vunpack.c.h.b16 %v769
        %v1032 = vunpack.c.l.b16 %v770
        %v1033 = vunpack.c.h.b16 %v770
        %v1034 = vunpack.c.l.b16 %v771
        %v1035 = vunpack.c.h.b16 %v771
        %v1036 = vunpack.c.l.b16 %v772
        %v1037 = vunpack.c.h.b16 %v772
        %v1038 = vunpack.c.l.b16 %v773
        %v1039 = vunpack.c.h.b16 %v773
        %v1040 = vunpack.c.l.b16 %v774
        %v1041 = vunpack.c.h.b16 %v774
        %v1042 = vunpack.c.l.b16 %v775
        %v1043 = vunpack.c.h.b16 %v775
        %v1044 = vunpack.c.l.b16 %v776
        %v1045 = vunpack.c.h.b16 %v776
        %v1046 = vunpack.c.l.b16 %v777
        %v1047 = vunpack.c.h.b16 %v777
        %v1048 = vunpack.c.l.b16 %v778
        %v1049 = vunpack.c.h.b16 %v778
        %v1050 = vunpack.c.l.b16 %v779
        %v1051 = vunpack.c.h.b16 %v779
        %v1052 = vunpack.c.l.b16 %v780
        %v1053 = vunpack.c.h.b16 %v780
        %v1054 = vunpack.c.l.b16 %v781
        %v1055 = vunpack.c.h.b16 %v781
        %v1056 = vunpack.c.l.b16 %v782
        %v1057 = vunpack.c.h.b16 %v782
        %v1058 = vunpack.c.l.b16 %v783
        %v1059 = vunpack.c.h.b16 %v783
        %v1060 = vunpack.c.l.b16 %v784
        %v1061 = vunpack.c.h.b16 %v784
        %v1062 = vunpack.c.l.b16 %v785
        %v1063 = vunpack.c.h.b16 %v785
        %v1064 = vunpack.c.l.b16 %v786
        %v1065 = vunpack.c.h.b16 %v786
        %v1066 = vunpack.c.l.b16 %v787
        %v1067 = vunpack.c.h.b16 %v787
        %v1068 = vunpack.c.l.b16 %v788
        %v1069 = vunpack.c.h.b16 %v788
        %v1070 = vunpack.c.l.b16 %v789
        %v1071 = vunpack.c.h.b16 %v789
        %v1072 = vunpack.c.l.b16 %v790
        %v1073 = vunpack.c.h.b16 %v790
        %v1074 = vunpack.c.l.b16 %v791
        %v1075 = vunpack.c.h.b16 %v791
        %v1076 = vunpack.c.l.b16 %v792
        %v1077 = vunpack.c.h.b16 %v792
        %v1078 = vunpack.c.l.b16 %v793
        %v1079 = vunpack.c.h.b16 %v793
        %v1080 = vunpack.c.l.b16 %v794
        %v1081 = vunpack.c.h.b16 %v794
        %v1082 = vunpack.c.l.b16 %v795
        %v1083 = vunpack.c.h.b16 %v795
        %v1084 = vunpack.c.l.b16 %v796
        %v1085 = vunpack.c.h.b16 %v796
        %v1086 = vunpack.c.l.b16 %v797
        %v1087 = vunpack.c.h.b16 %v797
        %v1088 = vunpack.c.l.b16 %v798
        %v1089 = vunpack.c.h.b16 %v798
        %v1090 = vunpack.c.l.b16 %v799
        %v1091 = vunpack.c.h.b16 %v799
        %v1092 = vunpack.c.l.b16 %v800
        %v1093 = vunpack.c.h.b16 %v800
        %v1094 = vunpack.c.l.b16 %v801
        %v1095 = vunpack.c.h.b16 %v801
        %v1096 = vunpack.c.l.b16 %v802
        %v1097 = vunpack.c.h.b16 %v802
        %v1098 = vunpack.c.l.b16 %v803
        %v1099 = vunpack.c.h.b16 %v803
        %v1100 = vunpack.c.l.b16 %v804
        %v1101 = vunpack.c.h.b16 %v804
        %v1102 = vunpack.c.l.b16 %v805
        %v1103 = vunpack.c.h.b16 %v805
        %v1104 = vunpack.c.l.b16 %v806
        %v1105 = vunpack.c.h.b16 %v806
        %v1106 = vunpack.c.l.b16 %v807
        %v1107 = vunpack.c.h.b16 %v807
        %v1108 = vunpack.c.l.b16 %v808
        %v1109 = vunpack.c.h.b16 %v808
        %v1110 = vunpack.c.l.b16 %v809
        %v1111 = vunpack.c.h.b16 %v809
        %v1112 = vunpack.c.l.b16 %v810
        %v1113 = vunpack.c.h.b16 %v810
        %v1114 = vunpack.c.l.b16 %v811
        %v1115 = vunpack.c.h.b16 %v811
        %v1116 = vunpack.c.l.b16 %v812
        %v1117 = vunpack.c.h.b16 %v812
        %v1118 = vunpack.c.l.b16 %v813
        %v1119 = vunpack.c.h.b16 %v813
        %v1120 = vunpack.c.l.b16 %v814
        %v1121 = vunpack.c.h.b16 %v814
        %v1122 = vunpack.c.l.b16 %v815
        %v1123 = vunpack.c.h.b16 %v815
        %v1124 = vunpack.c.l.b16 %v816
        %v1125 = vunpack.c.h.b16 %v816
        %v1126 = vunpack.c.l.b16 %v817
        %v1127 = vunpack.c.h.b16 %v817
        %v1128 = vunpack.c.l.b16 %v818
        %v1129 = vunpack.c.h.b16 %v818
        %v1130 = vunpack.c.l.b16 %v819
        %v1131 = vunpack.c.h.b16 %v819
        %v1132 = vunpack.c.l.b16 %v820
        %v1133 = vunpack.c.h.b16 %v820
        %v1134 = vunpack.c.l.b16 %v821
        %v1135 = vunpack.c.h.b16 %v821
        %v1136 = vunpack.c.l.b16 %v822
        %v1137 = vunpack.c.h.b16 %v822
        %v1138 = vunpack.c.l.b16 %v823
        %v1139 = vunpack.c.h.b16 %v823
        %v1140 = vunpack.c.l.b16 %v824
        %v1141 = vunpack.c.h.b16 %v824
        %v1142 = vunpack.c.l.b16 %v825
        %v1143 = vunpack.c.h.b16 %v825
        %v1144 = vunpack.c.l.b16 %v826
        %v1145 = vunpack.c.h.b16 %v826
        %v1146 = vunpack.c.l.b16 %v827
        %v1147 = vunpack.c.h.b16 %v827
        %v1148 = vpack.c.b16 %v962, %v956
        %v1149 = vpack.c.b16 %v963, %v957
        %v1150 = vpack.c.b16 %v964, %v958
        %v1151 = vpack.c.b16 %v965, %v959
        %v1152 = vpack.c.b16 %v966, %v960
        %v1153 = vpack.c.b16 %v967, %v961
        %v1154 = vpack.c.b16 %v974, %v968
        %v1155 = vpack.c.b16 %v975, %v969
        %v1156 = vpack.c.b16 %v976, %v970
        %v1157 = vpack.c.b16 %v977, %v971
        %v1158 = vpack.c.b16 %v978, %v972
        %v1159 = vpack.c.b16 %v979, %v973
        %v1160 = vpack.c.b16 %v986, %v980
        %v1161 = vpack.c.b16 %v987, %v981
        %v1162 = vpack.c.b16 %v988, %v982
        %v1163 = vpack.c.b16 %v989, %v983
        %v1164 = vpack.c.b16 %v990, %v984
        %v1165 = vpack.c.b16 %v991, %v985
        %v1166 = vpack.c.b16 %v998, %v992
        %v1167 = vpack.c.b16 %v999, %v993
        %v1168 = vpack.c.b16 %v1000, %v994
        %v1169 = vpack.c.b16 %v1001, %v995
        %v1170 = vpack.c.b16 %v1002, %v996
        %v1171 = vpack.c.b16 %v1003, %v997
        %v1172 = vpack.c.b16 %v1010, %v1004
        %v1173 = vpack.c.b16 %v1011, %v1005
        %v1174 = vpack.c.b16 %v1012, %v1006
        %v1175 = vpack.c.b16 %v1013, %v1007
        %v1176 = vpack.c.b16 %v1014, %v1008
        %v1177 = vpack.c.b16 %v1015, %v1009
        %v1178 = vpack.c.b16 %v1022, %v1016
        %v1179 = vpack.c.b16 %v1023, %v1017
        %v1180 = vpack.c.b16 %v1024, %v1018
        %v1181 = vpack.c.b16 %v1025, %v1019
        %v1182 = vpack.c.b16 %v1026, %v1020
        %v1183 = vpack.c.b16 %v1027, %v1021
        %v1184 = vpack.c.b16 %v1034, %v1028
        %v1185 = vpack.c.b16 %v1035, %v1029
        %v1186 = vpack.c.b16 %v1036, %v1030
        %v1187 = vpack.c.b16 %v1037, %v1031
        %v1188 = vpack.c.b16 %v1038, %v1032
        %v1189 = vpack.c.b16 %v1039, %v1033
        %v1190 = vpack.c.b16 %v1046, %v1040
        %v1191 = vpack.c.b16 %v1047, %v1041
        %v1192 = vpack.c.b16 %v1048, %v1042
        %v1193 = vpack.c.b16 %v1049, %v1043
        %v1194 = vpack.c.b16 %v1050, %v1044
        %v1195 = vpack.c.b16 %v1051, %v1045
        %v1196 = vpack.c.b16 %v1058, %v1052
        %v1197 = vpack.c.b16 %v1059, %v1053
        %v1198 = vpack.c.b16 %v1060, %v1054
        %v1199 = vpack.c.b16 %v1061, %v1055
        %v1200 = vpack.c.b16 %v1062, %v1056
        %v1201 = vpack.c.b16 %v1063, %v1057
        %v1202 = vpack.c.b16 %v1070, %v1064
        %v1203 = vpack.c.b16 %v1071, %v1065
        %v1204 = vpack.c.b16 %v1072, %v1066
        %v1205 = vpack.c.b16 %v1073, %v1067
        %v1206 = vpack.c.b16 %v1074, %v1068
        %v1207 = vpack.c.b16 %v1075, %v1069
        %v1208 = vpack.c.b16 %v1082, %v1076
        %v1209 = vpack.c.b16 %v1083, %v1077
        %v1210 = vpack.c.b16 %v1084, %v1078
        %v1211 = vpack.c.b16 %v1085, %v1079
        %v1212 = vpack.c.b16 %v1086, %v1080
        %v1213 = vpack.c.b16 %v1087, %v1081
        %v1214 = vpack.c.b16 %v1094, %v1088
        %v1215 = vpack.c.b16 %v1095, %v1089
        %v1216 = vpack.c.b16 %v1096, %v1090
        %v1217 = vpack.c.b16 %v1097, %v1091
        %v1218 = vpack.c.b16 %v1098, %v1092
        %v1219 = vpack.c.b16 %v1099, %v1093
        %v1220 = vpack.c.b16 %v1106, %v1100
        %v1221 = vpack.c.b16 %v1107, %v1101
        %v1222 = vpack.c.b16 %v1108, %v1102
        %v1223 = vpack.c.b16 %v1109, %v1103
        %v1224 = vpack.c.b16 %v1110, %v1104
        %v1225 = vpack.c.b16 %v1111, %v1105
        %v1226 = vpack.c.b16 %v1118, %v1112
        %v1227 = vpack.c.b16 %v1119, %v1113
        %v1228 = vpack.c.b16 %v1120, %v1114
        %v1229 = vpack.c.b16 %v1121, %v1115
        %v1230 = vpack.c.b16 %v1122, %v1116
        %v1231 = vpack.c.b16 %v1123, %v1117
        %v1232 = vpack.c.b16 %v1130, %v1124
        %v1233 = vpack.c.b16 %v1131, %v1125
        %v1234 = vpack.c.b16 %v1132, %v1126
        %v1235 = vpack.c.b16 %v1133, %v1127
        %v1236 = vpack.c.b16 %v1134, %v1128
        %v1237 = vpack.c.b16 %v1135, %v1129
        %v1238 = vpack.c.b16 %v1142, %v1136
        %v1239 = vpack.c.b16 %v1143, %v1137
        %v1240 = vpack.c.b16 %v1144, %v1138
        %v1241 = vpack.c.b16 %v1145, %v1139
        %v1242 = vpack.c.b16 %v1146, %v1140
        %v1243 = vpack.c.b16 %v1147, %v1141
        %1340 = vmatprep.subr.bf16.mxu0 %v1191
        %1341 = vmatpush1.bf16.msra.mxu0 %v1190
        %1342 = vmatprep.subr.bf16.mxu0 %v1185
        %1343 = vmatpush1.bf16.msra.mxu0 %v1184
        %1344 = vmatprep.subr.bf16.mxu0 %v1179
        %1345 = vmatpush1.bf16.msra.mxu0 %v1178
        %1346 = vmatprep.subr.bf16.mxu0 %v1173
        %1347 = vmatpush1.bf16.msra.mxu0 %v1172
        %1348 = vmatprep.subr.bf16.mxu0 %v1167
        %1349 = vmatpush1.bf16.msra.mxu0 %v1166
        %1350 = vmatprep.subr.bf16.mxu0 %v1161
        %1351 = vmatpush1.bf16.msra.mxu0 %v1160
        %1352 = vmatprep.subr.bf16.mxu0 %v1155
        %1353 = vmatpush1.bf16.msra.mxu0 %v1154
        %1354 = vmatprep.subr.bf16.mxu0 %v1149
        %1355 = vmatpush1.bf16.msra.mxu0 %v1148
        %1356 = vmatprep.subr.bf16.mxu0 %v1239
        %1357 = vmatpush2.bf16.msra.mxu0 %v1238
        %1358 = vmatprep.subr.bf16.mxu0 %v1233
        %1359 = vmatpush2.bf16.msra.mxu0 %v1232
        %1360 = vmatprep.subr.bf16.mxu0 %v1227
        %1361 = vmatpush2.bf16.msra.mxu0 %v1226
        %1362 = vmatprep.subr.bf16.mxu0 %v1221
        %1363 = vmatpush2.bf16.msra.mxu0 %v1220
        %1364 = vmatprep.subr.bf16.mxu0 %v1215
        %1365 = vmatpush2.bf16.msra.mxu0 %v1214
        %1366 = vmatprep.subr.bf16.mxu0 %v1209
        %1367 = vmatpush2.bf16.msra.mxu0 %v1208
        %1368 = vmatprep.subr.bf16.mxu0 %v1203
        %1369 = vmatpush2.bf16.msra.mxu0 %v1202
        %1370 = vmatprep.subr.bf16.mxu0 %v1197
        %1371 = vmatpush2.bf16.msra.mxu0 %v1196
        %1372 = vmatprep.mubr.bf16.mxu0 %v701
        %1373 = vmatmul.mubr.bf16.gmra.mxu0 %v700
        %v1374 = vpop.f32.mrf.mxu0
        %v1375 = vadd.f32 %v833, %v1374
        %v1376 = vpop.f32.mrf.mxu0
        %v1377 = vadd.f32 %v837, %v1376
        %v1378 = vpop.f32.mrf.mxu0
        %v1379 = vadd.f32 %v833, %v1378
        %v1380 = vpop.f32.mrf.mxu0
        %v1381 = vadd.f32 %v837, %v1380
        %1382 = vmatprep.mubr.bf16.mxu0 %v703
        %1383 = vmatmul.mubr.bf16.gmra.mxu0 %v702
        %v1384 = vpop.f32.mrf.mxu0
        %v1385 = vadd.f32 %v833, %v1384
        %v1386 = vpop.f32.mrf.mxu0
        %v1387 = vadd.f32 %v837, %v1386
        %v1388 = vpop.f32.mrf.mxu0
        %v1389 = vadd.f32 %v833, %v1388
        %v1390 = vpop.f32.mrf.mxu0
        %v1391 = vadd.f32 %v837, %v1390
        %1392 = vmatprep.mubr.bf16.mxu0 %v705
        %1393 = vmatmul.mubr.bf16.gmra.mxu0 %v704
        %v1394 = vpop.f32.mrf.mxu0
        %v1395 = vadd.f32 %v833, %v1394
        %v1396 = vpop.f32.mrf.mxu0
        %v1397 = vadd.f32 %v837, %v1396
        %v1398 = vpop.f32.mrf.mxu0
        %v1399 = vadd.f32 %v833, %v1398
        %v1400 = vpop.f32.mrf.mxu0
        %v1401 = vadd.f32 %v837, %v1400
        %1402 = vmatprep.mubr.bf16.mxu0 %v707
        %1403 = vmatmul.mubr.bf16.gmra.mxu0 %v706
        %v1404 = vpop.f32.mrf.mxu0
        %v1405 = vadd.f32 %v833, %v1404
        %v1406 = vpop.f32.mrf.mxu0
        %v1407 = vadd.f32 %v837, %v1406
        %v1408 = vpop.f32.mrf.mxu0
        %v1409 = vadd.f32 %v833, %v1408
        %v1410 = vpop.f32.mrf.mxu0
        %v1411 = vadd.f32 %v837, %v1410
        %1412 = vmatprep.mubr.bf16.mxu0 %v709
        %1413 = vmatmul.mubr.bf16.gmra.mxu0 %v708
        %v1414 = vpop.f32.mrf.mxu0
        %v1415 = vadd.f32 %v833, %v1414
        %v1416 = vpop.f32.mrf.mxu0
        %v1417 = vadd.f32 %v837, %v1416
        %v1418 = vpop.f32.mrf.mxu0
        %v1419 = vadd.f32 %v833, %v1418
        %v1420 = vpop.f32.mrf.mxu0
        %v1421 = vadd.f32 %v837, %v1420
        %1422 = vmatprep.mubr.bf16.mxu0 %v711
        %1423 = vmatmul.mubr.bf16.gmra.mxu0 %v710
        %v1424 = vpop.f32.mrf.mxu0
        %v1425 = vadd.f32 %v833, %v1424
        %v1426 = vpop.f32.mrf.mxu0
        %v1427 = vadd.f32 %v837, %v1426
        %v1428 = vpop.f32.mrf.mxu0
        %v1429 = vadd.f32 %v833, %v1428
        %v1430 = vpop.f32.mrf.mxu0
        %v1431 = vadd.f32 %v837, %v1430
        %1432 = vmatprep.mubr.bf16.mxu0 %v713
        %1433 = vmatmul.mubr.bf16.gmra.mxu0 %v712
        %v1434 = vpop.f32.mrf.mxu0
        %v1435 = vadd.f32 %v833, %v1434
        %v1436 = vpop.f32.mrf.mxu0
        %v1437 = vadd.f32 %v837, %v1436
        %v1438 = vpop.f32.mrf.mxu0
        %v1439 = vadd.f32 %v833, %v1438
        %v1440 = vpop.f32.mrf.mxu0
        %v1441 = vadd.f32 %v837, %v1440
        %1442 = vmatprep.mubr.bf16.mxu0 %v715
        %1443 = vmatmul.mubr.bf16.gmra.mxu0 %v714
        %v1444 = vpop.f32.mrf.mxu0
        %v1445 = vadd.f32 %v833, %v1444
        %v1446 = vpop.f32.mrf.mxu0
        %v1447 = vadd.f32 %v837, %v1446
        %v1448 = vpop.f32.mrf.mxu0
        %v1449 = vadd.f32 %v833, %v1448
        %v1450 = vpop.f32.mrf.mxu0
        %v1451 = vadd.f32 %v837, %v1450
        %1452 = vmatprep.mubr.bf16.mxu0 %v717
        %1453 = vmatmul.mubr.bf16.gmra.mxu0 %v716
        %v1454 = vpop.f32.mrf.mxu0
        %v1455 = vadd.f32 %v833, %v1454
        %v1456 = vpop.f32.mrf.mxu0
        %v1457 = vadd.f32 %v837, %v1456
        %v1458 = vpop.f32.mrf.mxu0
        %v1459 = vadd.f32 %v833, %v1458
        %v1460 = vpop.f32.mrf.mxu0
        %v1461 = vadd.f32 %v837, %v1460
        %1462 = vmatprep.mubr.bf16.mxu0 %v719
        %1463 = vmatmul.mubr.bf16.gmra.mxu0 %v718
        %v1464 = vpop.f32.mrf.mxu0
        %v1465 = vadd.f32 %v833, %v1464
        %v1466 = vpop.f32.mrf.mxu0
        %v1467 = vadd.f32 %v837, %v1466
        %v1468 = vpop.f32.mrf.mxu0
        %v1469 = vadd.f32 %v833, %v1468
        %v1470 = vpop.f32.mrf.mxu0
        %v1471 = vadd.f32 %v837, %v1470
        %1472 = vmatprep.mubr.bf16.mxu0 %v721
        %1473 = vmatmul.mubr.bf16.gmra.mxu0 %v720
        %v1474 = vpop.f32.mrf.mxu0
        %v1475 = vadd.f32 %v833, %v1474
        %v1476 = vpop.f32.mrf.mxu0
        %v1477 = vadd.f32 %v837, %v1476
        %v1478 = vpop.f32.mrf.mxu0
        %v1479 = vadd.f32 %v833, %v1478
        %v1480 = vpop.f32.mrf.mxu0
        %v1481 = vadd.f32 %v837, %v1480
        %1482 = vmatprep.mubr.bf16.mxu0 %v723
        %1483 = vmatmul.mubr.bf16.gmra.mxu0 %v722
        %v1484 = vpop.f32.mrf.mxu0
        %v1485 = vadd.f32 %v833, %v1484
        %v1486 = vpop.f32.mrf.mxu0
        %v1487 = vadd.f32 %v837, %v1486
        %v1488 = vpop.f32.mrf.mxu0
        %v1489 = vadd.f32 %v833, %v1488
        %v1490 = vpop.f32.mrf.mxu0
        %v1491 = vadd.f32 %v837, %v1490
        %1492 = vmatprep.mubr.bf16.mxu0 %v725
        %1493 = vmatmul.mubr.bf16.gmra.mxu0 %v724
        %v1494 = vpop.f32.mrf.mxu0
        %v1495 = vadd.f32 %v833, %v1494
        %v1496 = vpop.f32.mrf.mxu0
        %v1497 = vadd.f32 %v837, %v1496
        %v1498 = vpop.f32.mrf.mxu0
        %v1499 = vadd.f32 %v833, %v1498
        %v1500 = vpop.f32.mrf.mxu0
        %v1501 = vadd.f32 %v837, %v1500
        %1502 = vmatprep.mubr.bf16.mxu0 %v727
        %1503 = vmatmul.mubr.bf16.gmra.mxu0 %v726
        %v1504 = vpop.f32.mrf.mxu0
        %v1505 = vadd.f32 %v833, %v1504
        %v1506 = vpop.f32.mrf.mxu0
        %v1507 = vadd.f32 %v837, %v1506
        %v1508 = vpop.f32.mrf.mxu0
        %v1509 = vadd.f32 %v833, %v1508
        %v1510 = vpop.f32.mrf.mxu0
        %v1511 = vadd.f32 %v837, %v1510
        %1512 = vmatprep.mubr.bf16.mxu0 %v729
        %1513 = vmatmul.mubr.bf16.gmra.mxu0 %v728
        %v1514 = vpop.f32.mrf.mxu0
        %v1515 = vadd.f32 %v833, %v1514
        %v1516 = vpop.f32.mrf.mxu0
        %v1517 = vadd.f32 %v837, %v1516
        %v1518 = vpop.f32.mrf.mxu0
        %v1519 = vadd.f32 %v833, %v1518
        %v1520 = vpop.f32.mrf.mxu0
        %v1521 = vadd.f32 %v837, %v1520
        %1522 = vmatprep.mubr.bf16.mxu0 %v731
        %1523 = vmatmul.mubr.bf16.gmra.mxu0 %v730
        %v1524 = vpop.f32.mrf.mxu0
        %v1525 = vadd.f32 %v833, %v1524
        %v1526 = vpop.f32.mrf.mxu0
        %v1527 = vadd.f32 %v837, %v1526
        %v1528 = vpop.f32.mrf.mxu0
        %v1529 = vadd.f32 %v833, %v1528
        %v1530 = vpop.f32.mrf.mxu0
        %v1531 = vadd.f32 %v837, %v1530
        %1532 = vdwg.mxu0
        %1533 = vmatprep.subr.bf16.mxu0 %v1193
        %1534 = vmatpush1.bf16.msra.mxu0 %v1192
        %1535 = vmatprep.subr.bf16.mxu0 %v1187
        %1536 = vmatpush1.bf16.msra.mxu0 %v1186
        %1537 = vmatprep.subr.bf16.mxu0 %v1181
        %1538 = vmatpush1.bf16.msra.mxu0 %v1180
        %1539 = vmatprep.subr.bf16.mxu0 %v1175
        %1540 = vmatpush1.bf16.msra.mxu0 %v1174
        %1541 = vmatprep.subr.bf16.mxu0 %v1169
        %1542 = vmatpush1.bf16.msra.mxu0 %v1168
        %1543 = vmatprep.subr.bf16.mxu0 %v1163
        %1544 = vmatpush1.bf16.msra.mxu0 %v1162
        %1545 = vmatprep.subr.bf16.mxu0 %v1157
        %1546 = vmatpush1.bf16.msra.mxu0 %v1156
        %1547 = vmatprep.subr.bf16.mxu0 %v1151
        %1548 = vmatpush1.bf16.msra.mxu0 %v1150
        %1549 = vmatprep.subr.bf16.mxu0 %v1241
        %1550 = vmatpush2.bf16.msra.mxu0 %v1240
        %1551 = vmatprep.subr.bf16.mxu0 %v1235
        %1552 = vmatpush2.bf16.msra.mxu0 %v1234
        %1553 = vmatprep.subr.bf16.mxu0 %v1229
        %1554 = vmatpush2.bf16.msra.mxu0 %v1228
        %1555 = vmatprep.subr.bf16.mxu0 %v1223
        %1556 = vmatpush2.bf16.msra.mxu0 %v1222
        %1557 = vmatprep.subr.bf16.mxu0 %v1217
        %1558 = vmatpush2.bf16.msra.mxu0 %v1216
        %1559 = vmatprep.subr.bf16.mxu0 %v1211
        %1560 = vmatpush2.bf16.msra.mxu0 %v1210
        %1561 = vmatprep.subr.bf16.mxu0 %v1205
        %1562 = vmatpush2.bf16.msra.mxu0 %v1204
        %1563 = vmatprep.subr.bf16.mxu0 %v1199
        %1564 = vmatpush2.bf16.msra.mxu0 %v1198
        %1565 = vmatprep.mubr.bf16.mxu0 %v701
        %1566 = vmatmul.mubr.bf16.gmra.mxu0 %v700
        %v1567 = vpop.f32.mrf.mxu0
        %v1568 = vadd.f32 %v841, %v1567
        %v1569 = vpop.f32.mrf.mxu0
        %v1570 = vadd.f32 %v845, %v1569
        %v1571 = vpop.f32.mrf.mxu0
        %v1572 = vadd.f32 %v841, %v1571
        %v1573 = vpop.f32.mrf.mxu0
        %v1574 = vadd.f32 %v845, %v1573
        %1575 = vmatprep.mubr.bf16.mxu0 %v703
        %1576 = vmatmul.mubr.bf16.gmra.mxu0 %v702
        %v1577 = vpop.f32.mrf.mxu0
        %v1578 = vadd.f32 %v841, %v1577
        %v1579 = vpop.f32.mrf.mxu0
        %v1580 = vadd.f32 %v845, %v1579
        %v1581 = vpop.f32.mrf.mxu0
        %v1582 = vadd.f32 %v841, %v1581
        %v1583 = vpop.f32.mrf.mxu0
        %v1584 = vadd.f32 %v845, %v1583
        %1585 = vmatprep.mubr.bf16.mxu0 %v705
        %1586 = vmatmul.mubr.bf16.gmra.mxu0 %v704
        %v1587 = vpop.f32.mrf.mxu0
        %v1588 = vadd.f32 %v841, %v1587
        %v1589 = vpop.f32.mrf.mxu0
        %v1590 = vadd.f32 %v845, %v1589
        %v1591 = vpop.f32.mrf.mxu0
        %v1592 = vadd.f32 %v841, %v1591
        %v1593 = vpop.f32.mrf.mxu0
        %v1594 = vadd.f32 %v845, %v1593
        %1595 = vmatprep.mubr.bf16.mxu0 %v707
        %1596 = vmatmul.mubr.bf16.gmra.mxu0 %v706
        %v1597 = vpop.f32.mrf.mxu0
        %v1598 = vadd.f32 %v841, %v1597
        %v1599 = vpop.f32.mrf.mxu0
        %v1600 = vadd.f32 %v845, %v1599
        %v1601 = vpop.f32.mrf.mxu0
        %v1602 = vadd.f32 %v841, %v1601
        %v1603 = vpop.f32.mrf.mxu0
        %v1604 = vadd.f32 %v845, %v1603
        %1605 = vmatprep.mubr.bf16.mxu0 %v709
        %1606 = vmatmul.mubr.bf16.gmra.mxu0 %v708
        %v1607 = vpop.f32.mrf.mxu0
        %v1608 = vadd.f32 %v841, %v1607
        %v1609 = vpop.f32.mrf.mxu0
        %v1610 = vadd.f32 %v845, %v1609
        %v1611 = vpop.f32.mrf.mxu0
        %v1612 = vadd.f32 %v841, %v1611
        %v1613 = vpop.f32.mrf.mxu0
        %v1614 = vadd.f32 %v845, %v1613
        %1615 = vmatprep.mubr.bf16.mxu0 %v711
        %1616 = vmatmul.mubr.bf16.gmra.mxu0 %v710
        %v1617 = vpop.f32.mrf.mxu0
        %v1618 = vadd.f32 %v841, %v1617
        %v1619 = vpop.f32.mrf.mxu0
        %v1620 = vadd.f32 %v845, %v1619
        %v1621 = vpop.f32.mrf.mxu0
        %v1622 = vadd.f32 %v841, %v1621
        %v1623 = vpop.f32.mrf.mxu0
        %v1624 = vadd.f32 %v845, %v1623
        %1625 = vmatprep.mubr.bf16.mxu0 %v713
        %1626 = vmatmul.mubr.bf16.gmra.mxu0 %v712
        %v1627 = vpop.f32.mrf.mxu0
        %v1628 = vadd.f32 %v841, %v1627
        %v1629 = vpop.f32.mrf.mxu0
        %v1630 = vadd.f32 %v845, %v1629
        %v1631 = vpop.f32.mrf.mxu0
        %v1632 = vadd.f32 %v841, %v1631
        %v1633 = vpop.f32.mrf.mxu0
        %v1634 = vadd.f32 %v845, %v1633
        %1635 = vmatprep.mubr.bf16.mxu0 %v715
        %1636 = vmatmul.mubr.bf16.gmra.mxu0 %v714
        %v1637 = vpop.f32.mrf.mxu0
        %v1638 = vadd.f32 %v841, %v1637
        %v1639 = vpop.f32.mrf.mxu0
        %v1640 = vadd.f32 %v845, %v1639
        %v1641 = vpop.f32.mrf.mxu0
        %v1642 = vadd.f32 %v841, %v1641
        %v1643 = vpop.f32.mrf.mxu0
        %v1644 = vadd.f32 %v845, %v1643
        %1645 = vmatprep.mubr.bf16.mxu0 %v717
        %1646 = vmatmul.mubr.bf16.gmra.mxu0 %v716
        %v1647 = vpop.f32.mrf.mxu0
        %v1648 = vadd.f32 %v841, %v1647
        %v1649 = vpop.f32.mrf.mxu0
        %v1650 = vadd.f32 %v845, %v1649
        %v1651 = vpop.f32.mrf.mxu0
        %v1652 = vadd.f32 %v841, %v1651
        %v1653 = vpop.f32.mrf.mxu0
        %v1654 = vadd.f32 %v845, %v1653
        %1655 = vmatprep.mubr.bf16.mxu0 %v719
        %1656 = vmatmul.mubr.bf16.gmra.mxu0 %v718
        %v1657 = vpop.f32.mrf.mxu0
        %v1658 = vadd.f32 %v841, %v1657
        %v1659 = vpop.f32.mrf.mxu0
        %v1660 = vadd.f32 %v845, %v1659
        %v1661 = vpop.f32.mrf.mxu0
        %v1662 = vadd.f32 %v841, %v1661
        %v1663 = vpop.f32.mrf.mxu0
        %v1664 = vadd.f32 %v845, %v1663
        %1665 = vmatprep.mubr.bf16.mxu0 %v721
        %1666 = vmatmul.mubr.bf16.gmra.mxu0 %v720
        %v1667 = vpop.f32.mrf.mxu0
        %v1668 = vadd.f32 %v841, %v1667
        %v1669 = vpop.f32.mrf.mxu0
        %v1670 = vadd.f32 %v845, %v1669
        %v1671 = vpop.f32.mrf.mxu0
        %v1672 = vadd.f32 %v841, %v1671
        %v1673 = vpop.f32.mrf.mxu0
        %v1674 = vadd.f32 %v845, %v1673
        %1675 = vmatprep.mubr.bf16.mxu0 %v723
        %1676 = vmatmul.mubr.bf16.gmra.mxu0 %v722
        %v1677 = vpop.f32.mrf.mxu0
        %v1678 = vadd.f32 %v841, %v1677
        %v1679 = vpop.f32.mrf.mxu0
        %v1680 = vadd.f32 %v845, %v1679
        %v1681 = vpop.f32.mrf.mxu0
        %v1682 = vadd.f32 %v841, %v1681
        %v1683 = vpop.f32.mrf.mxu0
        %v1684 = vadd.f32 %v845, %v1683
        %1685 = vmatprep.mubr.bf16.mxu0 %v725
        %1686 = vmatmul.mubr.bf16.gmra.mxu0 %v724
        %v1687 = vpop.f32.mrf.mxu0
        %v1688 = vadd.f32 %v841, %v1687
        %v1689 = vpop.f32.mrf.mxu0
        %v1690 = vadd.f32 %v845, %v1689
        %v1691 = vpop.f32.mrf.mxu0
        %v1692 = vadd.f32 %v841, %v1691
        %v1693 = vpop.f32.mrf.mxu0
        %v1694 = vadd.f32 %v845, %v1693
        %1695 = vmatprep.mubr.bf16.mxu0 %v727
        %1696 = vmatmul.mubr.bf16.gmra.mxu0 %v726
        %v1697 = vpop.f32.mrf.mxu0
        %v1698 = vadd.f32 %v841, %v1697
        %v1699 = vpop.f32.mrf.mxu0
        %v1700 = vadd.f32 %v845, %v1699
        %v1701 = vpop.f32.mrf.mxu0
        %v1702 = vadd.f32 %v841, %v1701
        %v1703 = vpop.f32.mrf.mxu0
        %v1704 = vadd.f32 %v845, %v1703
        %1705 = vmatprep.mubr.bf16.mxu0 %v729
        %1706 = vmatmul.mubr.bf16.gmra.mxu0 %v728
        %v1707 = vpop.f32.mrf.mxu0
        %v1708 = vadd.f32 %v841, %v1707
        %v1709 = vpop.f32.mrf.mxu0
        %v1710 = vadd.f32 %v845, %v1709
        %v1711 = vpop.f32.mrf.mxu0
        %v1712 = vadd.f32 %v841, %v1711
        %v1713 = vpop.f32.mrf.mxu0
        %v1714 = vadd.f32 %v845, %v1713
        %1715 = vmatprep.mubr.bf16.mxu0 %v731
        %1716 = vmatmul.mubr.bf16.gmra.mxu0 %v730
        %v1717 = vpop.f32.mrf.mxu0
        %v1718 = vadd.f32 %v841, %v1717
        %v1719 = vpop.f32.mrf.mxu0
        %v1720 = vadd.f32 %v845, %v1719
        %v1721 = vpop.f32.mrf.mxu0
        %v1722 = vadd.f32 %v841, %v1721
        %v1723 = vpop.f32.mrf.mxu0
        %v1724 = vadd.f32 %v845, %v1723
        %1725 = vdwg.mxu0
        %1726 = vmatprep.subr.bf16.mxu0 %v1195
        %1727 = vmatpush1.bf16.msra.mxu0 %v1194
        %1728 = vmatprep.subr.bf16.mxu0 %v1189
        %1729 = vmatpush1.bf16.msra.mxu0 %v1188
        %1730 = vmatprep.subr.bf16.mxu0 %v1183
        %1731 = vmatpush1.bf16.msra.mxu0 %v1182
        %1732 = vmatprep.subr.bf16.mxu0 %v1177
        %1733 = vmatpush1.bf16.msra.mxu0 %v1176
        %1734 = vmatprep.subr.bf16.mxu0 %v1171
        %1735 = vmatpush1.bf16.msra.mxu0 %v1170
        %1736 = vmatprep.subr.bf16.mxu0 %v1165
        %1737 = vmatpush1.bf16.msra.mxu0 %v1164
        %1738 = vmatprep.subr.bf16.mxu0 %v1159
        %1739 = vmatpush1.bf16.msra.mxu0 %v1158
        %1740 = vmatprep.subr.bf16.mxu0 %v1153
        %1741 = vmatpush1.bf16.msra.mxu0 %v1152
        %1742 = vmatprep.subr.bf16.mxu0 %v1243
        %1743 = vmatpush2.bf16.msra.mxu0 %v1242
        %1744 = vmatprep.subr.bf16.mxu0 %v1237
        %1745 = vmatpush2.bf16.msra.mxu0 %v1236
        %1746 = vmatprep.subr.bf16.mxu0 %v1231
        %1747 = vmatpush2.bf16.msra.mxu0 %v1230
        %1748 = vmatprep.subr.bf16.mxu0 %v1225
        %1749 = vmatpush2.bf16.msra.mxu0 %v1224
        %1750 = vmatprep.subr.bf16.mxu0 %v1219
        %1751 = vmatpush2.bf16.msra.mxu0 %v1218
        %1752 = vmatprep.subr.bf16.mxu0 %v1213
        %1753 = vmatpush2.bf16.msra.mxu0 %v1212
        %1754 = vmatprep.subr.bf16.mxu0 %v1207
        %1755 = vmatpush2.bf16.msra.mxu0 %v1206
        %1756 = vmatprep.subr.bf16.mxu0 %v1201
        %1757 = vmatpush2.bf16.msra.mxu0 %v1200
        %1758 = vmatprep.mubr.bf16.mxu0 %v701
        %1759 = vmatmul.mubr.bf16.gmra.mxu0 %v700
        %v1760 = vpop.f32.mrf.mxu0
        %v1761 = vadd.f32 %v849, %v1760
        %v1762 = vpop.f32.mrf.mxu0
        %v1763 = vadd.f32 %v853, %v1762
        %v1764 = vpop.f32.mrf.mxu0
        %v1765 = vadd.f32 %v849, %v1764
        %v1766 = vpop.f32.mrf.mxu0
        %v1767 = vadd.f32 %v853, %v1766
        %1768 = vmatprep.mubr.bf16.mxu0 %v703
        %1769 = vmatmul.mubr.bf16.gmra.mxu0 %v702
        %v1770 = vpop.f32.mrf.mxu0
        %v1771 = vadd.f32 %v849, %v1770
        %v1772 = vpop.f32.mrf.mxu0
        %v1773 = vadd.f32 %v853, %v1772
        %v1774 = vpop.f32.mrf.mxu0
        %v1775 = vadd.f32 %v849, %v1774
        %v1776 = vpop.f32.mrf.mxu0
        %v1777 = vadd.f32 %v853, %v1776
        %1778 = vmatprep.mubr.bf16.mxu0 %v705
        %1779 = vmatmul.mubr.bf16.gmra.mxu0 %v704
        %v1780 = vpop.f32.mrf.mxu0
        %v1781 = vadd.f32 %v849, %v1780
        %v1782 = vpop.f32.mrf.mxu0
        %v1783 = vadd.f32 %v853, %v1782
        %v1784 = vpop.f32.mrf.mxu0
        %v1785 = vadd.f32 %v849, %v1784
        %v1786 = vpop.f32.mrf.mxu0
        %v1787 = vadd.f32 %v853, %v1786
        %1788 = vmatprep.mubr.bf16.mxu0 %v707
        %1789 = vmatmul.mubr.bf16.gmra.mxu0 %v706
        %v1790 = vpop.f32.mrf.mxu0
        %v1791 = vadd.f32 %v849, %v1790
        %v1792 = vpop.f32.mrf.mxu0
        %v1793 = vadd.f32 %v853, %v1792
        %v1794 = vpop.f32.mrf.mxu0
        %v1795 = vadd.f32 %v849, %v1794
        %v1796 = vpop.f32.mrf.mxu0
        %v1797 = vadd.f32 %v853, %v1796
        %1798 = vmatprep.mubr.bf16.mxu0 %v709
        %1799 = vmatmul.mubr.bf16.gmra.mxu0 %v708
        %v1800 = vpop.f32.mrf.mxu0
        %v1801 = vadd.f32 %v849, %v1800
        %v1802 = vpop.f32.mrf.mxu0
        %v1803 = vadd.f32 %v853, %v1802
        %v1804 = vpop.f32.mrf.mxu0
        %v1805 = vadd.f32 %v849, %v1804
        %v1806 = vpop.f32.mrf.mxu0
        %v1807 = vadd.f32 %v853, %v1806
        %1808 = vmatprep.mubr.bf16.mxu0 %v711
        %1809 = vmatmul.mubr.bf16.gmra.mxu0 %v710
        %v1810 = vpop.f32.mrf.mxu0
        %v1811 = vadd.f32 %v849, %v1810
        %v1812 = vpop.f32.mrf.mxu0
        %v1813 = vadd.f32 %v853, %v1812
        %v1814 = vpop.f32.mrf.mxu0
        %v1815 = vadd.f32 %v849, %v1814
        %v1816 = vpop.f32.mrf.mxu0
        %v1817 = vadd.f32 %v853, %v1816
        %1818 = vmatprep.mubr.bf16.mxu0 %v713
        %1819 = vmatmul.mubr.bf16.gmra.mxu0 %v712
        %v1820 = vpop.f32.mrf.mxu0
        %v1821 = vadd.f32 %v849, %v1820
        %v1822 = vpop.f32.mrf.mxu0
        %v1823 = vadd.f32 %v853, %v1822
        %v1824 = vpop.f32.mrf.mxu0
        %v1825 = vadd.f32 %v849, %v1824
        %v1826 = vpop.f32.mrf.mxu0
        %v1827 = vadd.f32 %v853, %v1826
        %1828 = vmatprep.mubr.bf16.mxu0 %v715
        %1829 = vmatmul.mubr.bf16.gmra.mxu0 %v714
        %v1830 = vpop.f32.mrf.mxu0
        %v1831 = vadd.f32 %v849, %v1830
        %v1832 = vpop.f32.mrf.mxu0
        %v1833 = vadd.f32 %v853, %v1832
        %v1834 = vpop.f32.mrf.mxu0
        %v1835 = vadd.f32 %v849, %v1834
        %v1836 = vpop.f32.mrf.mxu0
        %v1837 = vadd.f32 %v853, %v1836
        %1838 = vmatprep.mubr.bf16.mxu0 %v717
        %1839 = vmatmul.mubr.bf16.gmra.mxu0 %v716
        %v1840 = vpop.f32.mrf.mxu0
        %v1841 = vadd.f32 %v849, %v1840
        %v1842 = vpop.f32.mrf.mxu0
        %v1843 = vadd.f32 %v853, %v1842
        %v1844 = vpop.f32.mrf.mxu0
        %v1845 = vadd.f32 %v849, %v1844
        %v1846 = vpop.f32.mrf.mxu0
        %v1847 = vadd.f32 %v853, %v1846
        %1848 = vmatprep.mubr.bf16.mxu0 %v719
        %1849 = vmatmul.mubr.bf16.gmra.mxu0 %v718
        %v1850 = vpop.f32.mrf.mxu0
        %v1851 = vadd.f32 %v849, %v1850
        %v1852 = vpop.f32.mrf.mxu0
        %v1853 = vadd.f32 %v853, %v1852
        %v1854 = vpop.f32.mrf.mxu0
        %v1855 = vadd.f32 %v849, %v1854
        %v1856 = vpop.f32.mrf.mxu0
        %v1857 = vadd.f32 %v853, %v1856
        %1858 = vmatprep.mubr.bf16.mxu0 %v721
        %1859 = vmatmul.mubr.bf16.gmra.mxu0 %v720
        %v1860 = vpop.f32.mrf.mxu0
        %v1861 = vadd.f32 %v849, %v1860
        %v1862 = vpop.f32.mrf.mxu0
        %v1863 = vadd.f32 %v853, %v1862
        %v1864 = vpop.f32.mrf.mxu0
        %v1865 = vadd.f32 %v849, %v1864
        %v1866 = vpop.f32.mrf.mxu0
        %v1867 = vadd.f32 %v853, %v1866
        %1868 = vmatprep.mubr.bf16.mxu0 %v723
        %1869 = vmatmul.mubr.bf16.gmra.mxu0 %v722
        %v1870 = vpop.f32.mrf.mxu0
        %v1871 = vadd.f32 %v849, %v1870
        %v1872 = vpop.f32.mrf.mxu0
        %v1873 = vadd.f32 %v853, %v1872
        %v1874 = vpop.f32.mrf.mxu0
        %v1875 = vadd.f32 %v849, %v1874
        %v1876 = vpop.f32.mrf.mxu0
        %v1877 = vadd.f32 %v853, %v1876
        %1878 = vmatprep.mubr.bf16.mxu0 %v725
        %1879 = vmatmul.mubr.bf16.gmra.mxu0 %v724
        %v1880 = vpop.f32.mrf.mxu0
        %v1881 = vadd.f32 %v849, %v1880
        %v1882 = vpop.f32.mrf.mxu0
        %v1883 = vadd.f32 %v853, %v1882
        %v1884 = vpop.f32.mrf.mxu0
        %v1885 = vadd.f32 %v849, %v1884
        %v1886 = vpop.f32.mrf.mxu0
        %v1887 = vadd.f32 %v853, %v1886
        %1888 = vmatprep.mubr.bf16.mxu0 %v727
        %1889 = vmatmul.mubr.bf16.gmra.mxu0 %v726
        %v1890 = vpop.f32.mrf.mxu0
        %v1891 = vadd.f32 %v849, %v1890
        %v1892 = vpop.f32.mrf.mxu0
        %v1893 = vadd.f32 %v853, %v1892
        %v1894 = vpop.f32.mrf.mxu0
        %v1895 = vadd.f32 %v849, %v1894
        %v1896 = vpop.f32.mrf.mxu0
        %v1897 = vadd.f32 %v853, %v1896
        %1898 = vmatprep.mubr.bf16.mxu0 %v729
        %1899 = vmatmul.mubr.bf16.gmra.mxu0 %v728
        %v1900 = vpop.f32.mrf.mxu0
        %v1901 = vadd.f32 %v849, %v1900
        %v1902 = vpop.f32.mrf.mxu0
        %v1903 = vadd.f32 %v853, %v1902
        %v1904 = vpop.f32.mrf.mxu0
        %v1905 = vadd.f32 %v849, %v1904
        %v1906 = vpop.f32.mrf.mxu0
        %v1907 = vadd.f32 %v853, %v1906
        %1908 = vmatprep.mubr.bf16.mxu0 %v731
        %1909 = vmatmul.mubr.bf16.gmra.mxu0 %v730
        %v1910 = vpop.f32.mrf.mxu0
        %v1911 = vadd.f32 %v849, %v1910
        %v1912 = vpop.f32.mrf.mxu0
        %v1913 = vadd.f32 %v853, %v1912
        %v1914 = vpop.f32.mrf.mxu0
        %v1915 = vadd.f32 %v849, %v1914
        %v1916 = vpop.f32.mrf.mxu0
        %v1917 = vadd.f32 %v853, %v1916
        %1918 = vdwg.mxu0
        %v1919 = vpack.c.bf16 %v1379, %v1375
        %v1920 = vpack.c.bf16 %v1381, %v1377
        %v1921 = vpack.c.bf16 %v1389, %v1385
        %v1922 = vpack.c.bf16 %v1391, %v1387
        %v1923 = vpack.c.bf16 %v1399, %v1395
        %v1924 = vpack.c.bf16 %v1401, %v1397
        %v1925 = vpack.c.bf16 %v1409, %v1405
        %v1926 = vpack.c.bf16 %v1411, %v1407
        %v1927 = vpack.c.bf16 %v1419, %v1415
        %v1928 = vpack.c.bf16 %v1421, %v1417
        %v1929 = vpack.c.bf16 %v1429, %v1425
        %v1930 = vpack.c.bf16 %v1431, %v1427
        %v1931 = vpack.c.bf16 %v1439, %v1435
        %v1932 = vpack.c.bf16 %v1441, %v1437
        %v1933 = vpack.c.bf16 %v1449, %v1445
        %v1934 = vpack.c.bf16 %v1451, %v1447
        %v1935 = vpack.c.bf16 %v1459, %v1455
        %v1936 = vpack.c.bf16 %v1461, %v1457
        %v1937 = vpack.c.bf16 %v1469, %v1465
        %v1938 = vpack.c.bf16 %v1471, %v1467
        %v1939 = vpack.c.bf16 %v1479, %v1475
        %v1940 = vpack.c.bf16 %v1481, %v1477
        %v1941 = vpack.c.bf16 %v1489, %v1485
        %v1942 = vpack.c.bf16 %v1491, %v1487
        %v1943 = vpack.c.bf16 %v1499, %v1495
        %v1944 = vpack.c.bf16 %v1501, %v1497
        %v1945 = vpack.c.bf16 %v1509, %v1505
        %v1946 = vpack.c.bf16 %v1511, %v1507
        %v1947 = vpack.c.bf16 %v1519, %v1515
        %v1948 = vpack.c.bf16 %v1521, %v1517
        %v1949 = vpack.c.bf16 %v1529, %v1525
        %v1950 = vpack.c.bf16 %v1531, %v1527
        %v1983 = vunpack.c.l.b16 %v1919
        %v1984 = vunpack.c.l.b16 %v1920
        %v1985 = vunpack.c.h.b16 %v1919
        %v1986 = vunpack.c.h.b16 %v1920
        %v1987 = vunpack.c.l.b16 %v1921
        %v1988 = vunpack.c.l.b16 %v1922
        %v1989 = vunpack.c.h.b16 %v1921
        %v1990 = vunpack.c.h.b16 %v1922
        %v1991 = vunpack.c.l.b16 %v1923
        %v1992 = vunpack.c.l.b16 %v1924
        %v1993 = vunpack.c.h.b16 %v1923
        %v1994 = vunpack.c.h.b16 %v1924
        %v1995 = vunpack.c.l.b16 %v1925
        %v1996 = vunpack.c.l.b16 %v1926
        %v1997 = vunpack.c.h.b16 %v1925
        %v1998 = vunpack.c.h.b16 %v1926
        %v1999 = vunpack.c.l.b16 %v1927
        %v2000 = vunpack.c.l.b16 %v1928
        %v2001 = vunpack.c.h.b16 %v1927
        %v2002 = vunpack.c.h.b16 %v1928
        %v2003 = vunpack.c.l.b16 %v1929
        %v2004 = vunpack.c.l.b16 %v1930
        %v2005 = vunpack.c.h.b16 %v1929
        %v2006 = vunpack.c.h.b16 %v1930
        %v2007 = vunpack.c.l.b16 %v1931
        %v2008 = vunpack.c.l.b16 %v1932
        %v2009 = vunpack.c.h.b16 %v1931
        %v2010 = vunpack.c.h.b16 %v1932
        %v2011 = vunpack.c.l.b16 %v1933
        %v2012 = vunpack.c.l.b16 %v1934
        %v2013 = vunpack.c.h.b16 %v1933
        %v2014 = vunpack.c.h.b16 %v1934
        %v2015 = vunpack.c.l.b16 %v1935
        %v2016 = vunpack.c.l.b16 %v1936
        %v2017 = vunpack.c.h.b16 %v1935
        %v2018 = vunpack.c.h.b16 %v1936
        %v2019 = vunpack.c.l.b16 %v1937
        %v2020 = vunpack.c.l.b16 %v1938
        %v2021 = vunpack.c.h.b16 %v1937
        %v2022 = vunpack.c.h.b16 %v1938
        %v2023 = vunpack.c.l.b16 %v1939
        %v2024 = vunpack.c.l.b16 %v1940
        %v2025 = vunpack.c.h.b16 %v1939
        %v2026 = vunpack.c.h.b16 %v1940
        %v2027 = vunpack.c.l.b16 %v1941
        %v2028 = vunpack.c.l.b16 %v1942
        %v2029 = vunpack.c.h.b16 %v1941
        %v2030 = vunpack.c.h.b16 %v1942
        %v2031 = vunpack.c.l.b16 %v1943
        %v2032 = vunpack.c.l.b16 %v1944
        %v2033 = vunpack.c.h.b16 %v1943
        %v2034 = vunpack.c.h.b16 %v1944
        %v2035 = vunpack.c.l.b16 %v1945
        %v2036 = vunpack.c.l.b16 %v1946
        %v2037 = vunpack.c.h.b16 %v1945
        %v2038 = vunpack.c.h.b16 %v1946
        %v2039 = vunpack.c.l.b16 %v1947
        %v2040 = vunpack.c.l.b16 %v1948
        %v2041 = vunpack.c.h.b16 %v1947
        %v2042 = vunpack.c.h.b16 %v1948
        %v2043 = vunpack.c.l.b16 %v1949
        %v2044 = vunpack.c.l.b16 %v1950
        %v2045 = vunpack.c.h.b16 %v1949
        %v2046 = vunpack.c.h.b16 %v1950
        %v2047 = vpack.c.b16 %v1984, %v1983
        %v2048 = vpack.c.b16 %v1986, %v1985
        %v2049 = vpack.c.b16 %v1988, %v1987
        %v2050 = vpack.c.b16 %v1990, %v1989
        %v2051 = vpack.c.b16 %v1992, %v1991
        %v2052 = vpack.c.b16 %v1994, %v1993
        %v2053 = vpack.c.b16 %v1996, %v1995
        %v2054 = vpack.c.b16 %v1998, %v1997
        %v2055 = vpack.c.b16 %v2000, %v1999
        %v2056 = vpack.c.b16 %v2002, %v2001
        %v2057 = vpack.c.b16 %v2004, %v2003
        %v2058 = vpack.c.b16 %v2006, %v2005
        %v2059 = vpack.c.b16 %v2008, %v2007
        %v2060 = vpack.c.b16 %v2010, %v2009
        %v2061 = vpack.c.b16 %v2012, %v2011
        %v2062 = vpack.c.b16 %v2014, %v2013
        %v2063 = vpack.c.b16 %v2016, %v2015
        %v2064 = vpack.c.b16 %v2018, %v2017
        %v2065 = vpack.c.b16 %v2020, %v2019
        %v2066 = vpack.c.b16 %v2022, %v2021
        %v2067 = vpack.c.b16 %v2024, %v2023
        %v2068 = vpack.c.b16 %v2026, %v2025
        %v2069 = vpack.c.b16 %v2028, %v2027
        %v2070 = vpack.c.b16 %v2030, %v2029
        %v2071 = vpack.c.b16 %v2032, %v2031
        %v2072 = vpack.c.b16 %v2034, %v2033
        %v2073 = vpack.c.b16 %v2036, %v2035
        %v2074 = vpack.c.b16 %v2038, %v2037
        %v2075 = vpack.c.b16 %v2040, %v2039
        %v2076 = vpack.c.b16 %v2042, %v2041
        %v2077 = vpack.c.b16 %v2044, %v2043
        %v2078 = vpack.c.b16 %v2046, %v2045
        %2111 = vst [vmem:[%s296] sm:$0xff] %v2047
        %2112 = vst [vmem:[%s296 + $0x8] sm:$0xff] %v2048
        %2113 = vst [vmem:[%s296 + $0x10] sm:$0xff] %v2049
        %2114 = vst [vmem:[%s296 + $0x18] sm:$0xff] %v2050
        %2115 = vst [vmem:[%s296 + $0x20] sm:$0xff] %v2051
        %2116 = vst [vmem:[%s296 + $0x28] sm:$0xff] %v2052
        %2117 = vst [vmem:[%s296 + $0x30] sm:$0xff] %v2053
        %2118 = vst [vmem:[%s296 + $0x38] sm:$0xff] %v2054
        %2119 = vst [vmem:[%s296 + $0x40] sm:$0xff] %v2055
        %2120 = vst [vmem:[%s296 + $0x48] sm:$0xff] %v2056
        %2121 = vst [vmem:[%s296 + $0x50] sm:$0xff] %v2057
        %2122 = vst [vmem:[%s296 + $0x58] sm:$0xff] %v2058
        %2123 = vst [vmem:[%s296 + $0x60] sm:$0xff] %v2059
        %2124 = vst [vmem:[%s296 + $0x68] sm:$0xff] %v2060
        %2125 = vst [vmem:[%s296 + $0x70] sm:$0xff] %v2061
        %2126 = vst [vmem:[%s296 + $0x78] sm:$0xff] %v2062
        %2127 = vst [vmem:[%s296 + $0x80] sm:$0xff] %v2063
        %2128 = vst [vmem:[%s296 + $0x88] sm:$0xff] %v2064
        %2129 = vst [vmem:[%s296 + $0x90] sm:$0xff] %v2065
        %2130 = vst [vmem:[%s296 + $0x98] sm:$0xff] %v2066
        %2131 = vst [vmem:[%s296 + $0xa0] sm:$0xff] %v2067
        %2132 = vst [vmem:[%s296 + $0xa8] sm:$0xff] %v2068
        %2133 = vst [vmem:[%s296 + $0xb0] sm:$0xff] %v2069
        %2134 = vst [vmem:[%s296 + $0xb8] sm:$0xff] %v2070
        %2135 = vst [vmem:[%s296 + $0xc0] sm:$0xff] %v2071
        %2136 = vst [vmem:[%s296 + $0xc8] sm:$0xff] %v2072
        %2137 = vst [vmem:[%s296 + $0xd0] sm:$0xff] %v2073
        %2138 = vst [vmem:[%s296 + $0xd8] sm:$0xff] %v2074
        %2139 = vst [vmem:[%s296 + $0xe0] sm:$0xff] %v2075
        %2140 = vst [vmem:[%s296 + $0xe8] sm:$0xff] %v2076
        %2141 = vst [vmem:[%s296 + $0xf0] sm:$0xff] %v2077
        %2142 = vst [vmem:[%s296 + $0xf8] sm:$0xff] %v2078
        %v2143 = vpack.c.bf16 %v1572, %v1568
        %v2144 = vpack.c.bf16 %v1574, %v1570
        %v2145 = vpack.c.bf16 %v1582, %v1578
        %v2146 = vpack.c.bf16 %v1584, %v1580
        %v2147 = vpack.c.bf16 %v1592, %v1588
        %v2148 = vpack.c.bf16 %v1594, %v1590
        %v2149 = vpack.c.bf16 %v1602, %v1598
        %v2150 = vpack.c.bf16 %v1604, %v1600
        %v2151 = vpack.c.bf16 %v1612, %v1608
        %v2152 = vpack.c.bf16 %v1614, %v1610
        %v2153 = vpack.c.bf16 %v1622, %v1618
        %v2154 = vpack.c.bf16 %v1624, %v1620
        %v2155 = vpack.c.bf16 %v1632, %v1628
        %v2156 = vpack.c.bf16 %v1634, %v1630
        %v2157 = vpack.c.bf16 %v1642, %v1638
        %v2158 = vpack.c.bf16 %v1644, %v1640
        %v2159 = vpack.c.bf16 %v1652, %v1648
        %v2160 = vpack.c.bf16 %v1654, %v1650
        %v2161 = vpack.c.bf16 %v1662, %v1658
        %v2162 = vpack.c.bf16 %v1664, %v1660
        %v2163 = vpack.c.bf16 %v1672, %v1668
        %v2164 = vpack.c.bf16 %v1674, %v1670
        %v2165 = vpack.c.bf16 %v1682, %v1678
        %v2166 = vpack.c.bf16 %v1684, %v1680
        %v2167 = vpack.c.bf16 %v1692, %v1688
        %v2168 = vpack.c.bf16 %v1694, %v1690
        %v2169 = vpack.c.bf16 %v1702, %v1698
        %v2170 = vpack.c.bf16 %v1704, %v1700
        %v2171 = vpack.c.bf16 %v1712, %v1708
        %v2172 = vpack.c.bf16 %v1714, %v1710
        %v2173 = vpack.c.bf16 %v1722, %v1718
        %v2174 = vpack.c.bf16 %v1724, %v1720
        %v2207 = vunpack.c.l.b16 %v2143
        %v2208 = vunpack.c.l.b16 %v2144
        %v2209 = vunpack.c.h.b16 %v2143
        %v2210 = vunpack.c.h.b16 %v2144
        %v2211 = vunpack.c.l.b16 %v2145
        %v2212 = vunpack.c.l.b16 %v2146
        %v2213 = vunpack.c.h.b16 %v2145
        %v2214 = vunpack.c.h.b16 %v2146
        %v2215 = vunpack.c.l.b16 %v2147
        %v2216 = vunpack.c.l.b16 %v2148
        %v2217 = vunpack.c.h.b16 %v2147
        %v2218 = vunpack.c.h.b16 %v2148
        %v2219 = vunpack.c.l.b16 %v2149
        %v2220 = vunpack.c.l.b16 %v2150
        %v2221 = vunpack.c.h.b16 %v2149
        %v2222 = vunpack.c.h.b16 %v2150
        %v2223 = vunpack.c.l.b16 %v2151
        %v2224 = vunpack.c.l.b16 %v2152
        %v2225 = vunpack.c.h.b16 %v2151
        %v2226 = vunpack.c.h.b16 %v2152
        %v2227 = vunpack.c.l.b16 %v2153
        %v2228 = vunpack.c.l.b16 %v2154
        %v2229 = vunpack.c.h.b16 %v2153
        %v2230 = vunpack.c.h.b16 %v2154
        %v2231 = vunpack.c.l.b16 %v2155
        %v2232 = vunpack.c.l.b16 %v2156
        %v2233 = vunpack.c.h.b16 %v2155
        %v2234 = vunpack.c.h.b16 %v2156
        %v2235 = vunpack.c.l.b16 %v2157
        %v2236 = vunpack.c.l.b16 %v2158
        %v2237 = vunpack.c.h.b16 %v2157
        %v2238 = vunpack.c.h.b16 %v2158
        %v2239 = vunpack.c.l.b16 %v2159
        %v2240 = vunpack.c.l.b16 %v2160
        %v2241 = vunpack.c.h.b16 %v2159
        %v2242 = vunpack.c.h.b16 %v2160
        %v2243 = vunpack.c.l.b16 %v2161
        %v2244 = vunpack.c.l.b16 %v2162
        %v2245 = vunpack.c.h.b16 %v2161
        %v2246 = vunpack.c.h.b16 %v2162
        %v2247 = vunpack.c.l.b16 %v2163
        %v2248 = vunpack.c.l.b16 %v2164
        %v2249 = vunpack.c.h.b16 %v2163
        %v2250 = vunpack.c.h.b16 %v2164
        %v2251 = vunpack.c.l.b16 %v2165
        %v2252 = vunpack.c.l.b16 %v2166
        %v2253 = vunpack.c.h.b16 %v2165
        %v2254 = vunpack.c.h.b16 %v2166
        %v2255 = vunpack.c.l.b16 %v2167
        %v2256 = vunpack.c.l.b16 %v2168
        %v2257 = vunpack.c.h.b16 %v2167
        %v2258 = vunpack.c.h.b16 %v2168
        %v2259 = vunpack.c.l.b16 %v2169
        %v2260 = vunpack.c.l.b16 %v2170
        %v2261 = vunpack.c.h.b16 %v2169
        %v2262 = vunpack.c.h.b16 %v2170
        %v2263 = vunpack.c.l.b16 %v2171
        %v2264 = vunpack.c.l.b16 %v2172
        %v2265 = vunpack.c.h.b16 %v2171
        %v2266 = vunpack.c.h.b16 %v2172
        %v2267 = vunpack.c.l.b16 %v2173
        %v2268 = vunpack.c.l.b16 %v2174
        %v2269 = vunpack.c.h.b16 %v2173
        %v2270 = vunpack.c.h.b16 %v2174
        %v2271 = vpack.c.b16 %v2208, %v2207
        %v2272 = vpack.c.b16 %v2210, %v2209
        %v2273 = vpack.c.b16 %v2212, %v2211
        %v2274 = vpack.c.b16 %v2214, %v2213
        %v2275 = vpack.c.b16 %v2216, %v2215
        %v2276 = vpack.c.b16 %v2218, %v2217
        %v2277 = vpack.c.b16 %v2220, %v2219
        %v2278 = vpack.c.b16 %v2222, %v2221
        %v2279 = vpack.c.b16 %v2224, %v2223
        %v2280 = vpack.c.b16 %v2226, %v2225
        %v2281 = vpack.c.b16 %v2228, %v2227
        %v2282 = vpack.c.b16 %v2230, %v2229
        %v2283 = vpack.c.b16 %v2232, %v2231
        %v2284 = vpack.c.b16 %v2234, %v2233
        %v2285 = vpack.c.b16 %v2236, %v2235
        %v2286 = vpack.c.b16 %v2238, %v2237
        %v2287 = vpack.c.b16 %v2240, %v2239
        %v2288 = vpack.c.b16 %v2242, %v2241
        %v2289 = vpack.c.b16 %v2244, %v2243
        %v2290 = vpack.c.b16 %v2246, %v2245
        %v2291 = vpack.c.b16 %v2248, %v2247
        %v2292 = vpack.c.b16 %v2250, %v2249
        %v2293 = vpack.c.b16 %v2252, %v2251
        %v2294 = vpack.c.b16 %v2254, %v2253
        %v2295 = vpack.c.b16 %v2256, %v2255
        %v2296 = vpack.c.b16 %v2258, %v2257
        %v2297 = vpack.c.b16 %v2260, %v2259
        %v2298 = vpack.c.b16 %v2262, %v2261
        %v2299 = vpack.c.b16 %v2264, %v2263
        %v2300 = vpack.c.b16 %v2266, %v2265
        %v2301 = vpack.c.b16 %v2268, %v2267
        %v2302 = vpack.c.b16 %v2270, %v2269
        %2335 = vst [vmem:[%s303] sm:$0xff] %v2271
        %2336 = vst [vmem:[%s303 + $0x8] sm:$0xff] %v2272
        %2337 = vst [vmem:[%s303 + $0x10] sm:$0xff] %v2273
        %2338 = vst [vmem:[%s303 + $0x18] sm:$0xff] %v2274
        %2339 = vst [vmem:[%s303 + $0x20] sm:$0xff] %v2275
        %2340 = vst [vmem:[%s303 + $0x28] sm:$0xff] %v2276
        %2341 = vst [vmem:[%s303 + $0x30] sm:$0xff] %v2277
        %2342 = vst [vmem:[%s303 + $0x38] sm:$0xff] %v2278
        %2343 = vst [vmem:[%s303 + $0x40] sm:$0xff] %v2279
        %2344 = vst [vmem:[%s303 + $0x48] sm:$0xff] %v2280
        %2345 = vst [vmem:[%s303 + $0x50] sm:$0xff] %v2281
        %2346 = vst [vmem:[%s303 + $0x58] sm:$0xff] %v2282
        %2347 = vst [vmem:[%s303 + $0x60] sm:$0xff] %v2283
        %2348 = vst [vmem:[%s303 + $0x68] sm:$0xff] %v2284
        %2349 = vst [vmem:[%s303 + $0x70] sm:$0xff] %v2285
        %2350 = vst [vmem:[%s303 + $0x78] sm:$0xff] %v2286
        %2351 = vst [vmem:[%s303 + $0x80] sm:$0xff] %v2287
        %2352 = vst [vmem:[%s303 + $0x88] sm:$0xff] %v2288
        %2353 = vst [vmem:[%s303 + $0x90] sm:$0xff] %v2289
        %2354 = vst [vmem:[%s303 + $0x98] sm:$0xff] %v2290
        %2355 = vst [vmem:[%s303 + $0xa0] sm:$0xff] %v2291
        %2356 = vst [vmem:[%s303 + $0xa8] sm:$0xff] %v2292
        %2357 = vst [vmem:[%s303 + $0xb0] sm:$0xff] %v2293
        %2358 = vst [vmem:[%s303 + $0xb8] sm:$0xff] %v2294
        %2359 = vst [vmem:[%s303 + $0xc0] sm:$0xff] %v2295
        %2360 = vst [vmem:[%s303 + $0xc8] sm:$0xff] %v2296
        %2361 = vst [vmem:[%s303 + $0xd0] sm:$0xff] %v2297
        %2362 = vst [vmem:[%s303 + $0xd8] sm:$0xff] %v2298
        %2363 = vst [vmem:[%s303 + $0xe0] sm:$0xff] %v2299
        %2364 = vst [vmem:[%s303 + $0xe8] sm:$0xff] %v2300
        %2365 = vst [vmem:[%s303 + $0xf0] sm:$0xff] %v2301
        %2366 = vst [vmem:[%s303 + $0xf8] sm:$0xff] %v2302
        %v2367 = vpack.c.bf16 %v1765, %v1761
        %v2368 = vpack.c.bf16 %v1767, %v1763
        %v2369 = vpack.c.bf16 %v1775, %v1771
        %v2370 = vpack.c.bf16 %v1777, %v1773
        %v2371 = vpack.c.bf16 %v1785, %v1781
        %v2372 = vpack.c.bf16 %v1787, %v1783
        %v2373 = vpack.c.bf16 %v1795, %v1791
        %v2374 = vpack.c.bf16 %v1797, %v1793
        %v2375 = vpack.c.bf16 %v1805, %v1801
        %v2376 = vpack.c.bf16 %v1807, %v1803
        %v2377 = vpack.c.bf16 %v1815, %v1811
        %v2378 = vpack.c.bf16 %v1817, %v1813
        %v2379 = vpack.c.bf16 %v1825, %v1821
        %v2380 = vpack.c.bf16 %v1827, %v1823
        %v2381 = vpack.c.bf16 %v1835, %v1831
        %v2382 = vpack.c.bf16 %v1837, %v1833
        %v2383 = vpack.c.bf16 %v1845, %v1841
        %v2384 = vpack.c.bf16 %v1847, %v1843
        %v2385 = vpack.c.bf16 %v1855, %v1851
        %v2386 = vpack.c.bf16 %v1857, %v1853
        %v2387 = vpack.c.bf16 %v1865, %v1861
        %v2388 = vpack.c.bf16 %v1867, %v1863
        %v2389 = vpack.c.bf16 %v1875, %v1871
        %v2390 = vpack.c.bf16 %v1877, %v1873
        %v2391 = vpack.c.bf16 %v1885, %v1881
        %v2392 = vpack.c.bf16 %v1887, %v1883
        %v2393 = vpack.c.bf16 %v1895, %v1891
        %v2394 = vpack.c.bf16 %v1897, %v1893
        %v2395 = vpack.c.bf16 %v1905, %v1901
        %v2396 = vpack.c.bf16 %v1907, %v1903
        %v2397 = vpack.c.bf16 %v1915, %v1911
        %v2398 = vpack.c.bf16 %v1917, %v1913
        %v2431 = vunpack.c.l.b16 %v2367
        %v2432 = vunpack.c.l.b16 %v2368
        %v2433 = vunpack.c.h.b16 %v2367
        %v2434 = vunpack.c.h.b16 %v2368
        %v2435 = vunpack.c.l.b16 %v2369
        %v2436 = vunpack.c.l.b16 %v2370
        %v2437 = vunpack.c.h.b16 %v2369
        %v2438 = vunpack.c.h.b16 %v2370
        %v2439 = vunpack.c.l.b16 %v2371
        %v2440 = vunpack.c.l.b16 %v2372
        %v2441 = vunpack.c.h.b16 %v2371
        %v2442 = vunpack.c.h.b16 %v2372
        %v2443 = vunpack.c.l.b16 %v2373
        %v2444 = vunpack.c.l.b16 %v2374
        %v2445 = vunpack.c.h.b16 %v2373
        %v2446 = vunpack.c.h.b16 %v2374
        %v2447 = vunpack.c.l.b16 %v2375
        %v2448 = vunpack.c.l.b16 %v2376
        %v2449 = vunpack.c.h.b16 %v2375
        %v2450 = vunpack.c.h.b16 %v2376
        %v2451 = vunpack.c.l.b16 %v2377
        %v2452 = vunpack.c.l.b16 %v2378
        %v2453 = vunpack.c.h.b16 %v2377
        %v2454 = vunpack.c.h.b16 %v2378
        %v2455 = vunpack.c.l.b16 %v2379
        %v2456 = vunpack.c.l.b16 %v2380
        %v2457 = vunpack.c.h.b16 %v2379
        %v2458 = vunpack.c.h.b16 %v2380
        %v2459 = vunpack.c.l.b16 %v2381
        %v2460 = vunpack.c.l.b16 %v2382
        %v2461 = vunpack.c.h.b16 %v2381
        %v2462 = vunpack.c.h.b16 %v2382
        %v2463 = vunpack.c.l.b16 %v2383
        %v2464 = vunpack.c.l.b16 %v2384
        %v2465 = vunpack.c.h.b16 %v2383
        %v2466 = vunpack.c.h.b16 %v2384
        %v2467 = vunpack.c.l.b16 %v2385
        %v2468 = vunpack.c.l.b16 %v2386
        %v2469 = vunpack.c.h.b16 %v2385
        %v2470 = vunpack.c.h.b16 %v2386
        %v2471 = vunpack.c.l.b16 %v2387
        %v2472 = vunpack.c.l.b16 %v2388
        %v2473 = vunpack.c.h.b16 %v2387
        %v2474 = vunpack.c.h.b16 %v2388
        %v2475 = vunpack.c.l.b16 %v2389
        %v2476 = vunpack.c.l.b16 %v2390
        %v2477 = vunpack.c.h.b16 %v2389
        %v2478 = vunpack.c.h.b16 %v2390
        %v2479 = vunpack.c.l.b16 %v2391
        %v2480 = vunpack.c.l.b16 %v2392
        %v2481 = vunpack.c.h.b16 %v2391
        %v2482 = vunpack.c.h.b16 %v2392
        %v2483 = vunpack.c.l.b16 %v2393
        %v2484 = vunpack.c.l.b16 %v2394
        %v2485 = vunpack.c.h.b16 %v2393
        %v2486 = vunpack.c.h.b16 %v2394
        %v2487 = vunpack.c.l.b16 %v2395
        %v2488 = vunpack.c.l.b16 %v2396
        %v2489 = vunpack.c.h.b16 %v2395
        %v2490 = vunpack.c.h.b16 %v2396
        %v2491 = vunpack.c.l.b16 %v2397
        %v2492 = vunpack.c.l.b16 %v2398
        %v2493 = vunpack.c.h.b16 %v2397
        %v2494 = vunpack.c.h.b16 %v2398
        %v2495 = vpack.c.b16 %v2432, %v2431
        %v2496 = vpack.c.b16 %v2434, %v2433
        %v2497 = vpack.c.b16 %v2436, %v2435
        %v2498 = vpack.c.b16 %v2438, %v2437
        %v2499 = vpack.c.b16 %v2440, %v2439
        %v2500 = vpack.c.b16 %v2442, %v2441
        %v2501 = vpack.c.b16 %v2444, %v2443
        %v2502 = vpack.c.b16 %v2446, %v2445
        %v2503 = vpack.c.b16 %v2448, %v2447
        %v2504 = vpack.c.b16 %v2450, %v2449
        %v2505 = vpack.c.b16 %v2452, %v2451
        %v2506 = vpack.c.b16 %v2454, %v2453
        %v2507 = vpack.c.b16 %v2456, %v2455
        %v2508 = vpack.c.b16 %v2458, %v2457
        %v2509 = vpack.c.b16 %v2460, %v2459
        %v2510 = vpack.c.b16 %v2462, %v2461
        %v2511 = vpack.c.b16 %v2464, %v2463
        %v2512 = vpack.c.b16 %v2466, %v2465
        %v2513 = vpack.c.b16 %v2468, %v2467
        %v2514 = vpack.c.b16 %v2470, %v2469
        %v2515 = vpack.c.b16 %v2472, %v2471
        %v2516 = vpack.c.b16 %v2474, %v2473
        %v2517 = vpack.c.b16 %v2476, %v2475
        %v2518 = vpack.c.b16 %v2478, %v2477
        %v2519 = vpack.c.b16 %v2480, %v2479
        %v2520 = vpack.c.b16 %v2482, %v2481
        %v2521 = vpack.c.b16 %v2484, %v2483
        %v2522 = vpack.c.b16 %v2486, %v2485
        %v2523 = vpack.c.b16 %v2488, %v2487
        %v2524 = vpack.c.b16 %v2490, %v2489
        %v2525 = vpack.c.b16 %v2492, %v2491
        %v2526 = vpack.c.b16 %v2494, %v2493
        %2559 = vst [vmem:[%s310] sm:$0xff] %v2495
        %2560 = vst [vmem:[%s310 + $0x8] sm:$0xff] %v2496
        %2561 = vst [vmem:[%s310 + $0x10] sm:$0xff] %v2497
        %2562 = vst [vmem:[%s310 + $0x18] sm:$0xff] %v2498
        %2563 = vst [vmem:[%s310 + $0x20] sm:$0xff] %v2499
        %2564 = vst [vmem:[%s310 + $0x28] sm:$0xff] %v2500
        %2565 = vst [vmem:[%s310 + $0x30] sm:$0xff] %v2501
        %2566 = vst [vmem:[%s310 + $0x38] sm:$0xff] %v2502
        %2567 = vst [vmem:[%s310 + $0x40] sm:$0xff] %v2503
        %2568 = vst [vmem:[%s310 + $0x48] sm:$0xff] %v2504
        %2569 = vst [vmem:[%s310 + $0x50] sm:$0xff] %v2505
        %2570 = vst [vmem:[%s310 + $0x58] sm:$0xff] %v2506
        %2571 = vst [vmem:[%s310 + $0x60] sm:$0xff] %v2507
        %2572 = vst [vmem:[%s310 + $0x68] sm:$0xff] %v2508
        %2573 = vst [vmem:[%s310 + $0x70] sm:$0xff] %v2509
        %2574 = vst [vmem:[%s310 + $0x78] sm:$0xff] %v2510
        %2575 = vst [vmem:[%s310 + $0x80] sm:$0xff] %v2511
        %2576 = vst [vmem:[%s310 + $0x88] sm:$0xff] %v2512
        %2577 = vst [vmem:[%s310 + $0x90] sm:$0xff] %v2513
        %2578 = vst [vmem:[%s310 + $0x98] sm:$0xff] %v2514
        %2579 = vst [vmem:[%s310 + $0xa0] sm:$0xff] %v2515
        %2580 = vst [vmem:[%s310 + $0xa8] sm:$0xff] %v2516
        %2581 = vst [vmem:[%s310 + $0xb0] sm:$0xff] %v2517
        %2582 = vst [vmem:[%s310 + $0xb8] sm:$0xff] %v2518
        %2583 = vst [vmem:[%s310 + $0xc0] sm:$0xff] %v2519
        %2584 = vst [vmem:[%s310 + $0xc8] sm:$0xff] %v2520
        %2585 = vst [vmem:[%s310 + $0xd0] sm:$0xff] %v2521
        %2586 = vst [vmem:[%s310 + $0xd8] sm:$0xff] %v2522
        %2587 = vst [vmem:[%s310 + $0xe0] sm:$0xff] %v2523
        %2588 = vst [vmem:[%s310 + $0xe8] sm:$0xff] %v2524
        %2589 = vst [vmem:[%s310 + $0xf0] sm:$0xff] %v2525
        %2590 = vst [vmem:[%s310 + $0xf8] sm:$0xff] %v2526
        %s2591 = sand.u32 %s119, 1
        %s2592 = scalar_lea.sflag [#allocation4], %s2591
        %s2593 = sand.u32 %s119, 1
        %s2594 = smul.addr %s2593, 256
        %s2595 = scalar_lea.vmem [#allocation8], %s2594
        %s2596 = sand.u32 %s27, 1
        %s2597 = scalar_lea.sflag [#allocation10], %s2596
        %s2598 = sand.u32 %s147, 1
        %s2599 = smul.addr %s2598, 256
        %s2600 = scalar_lea.vmem [#allocation9], %s2599
        %s2601 = sand.u32 %s27, 1
        %s2602 = scalar_lea.sflag [#allocation10], %s2601
        %s2603 = sand.u32 %s175, 1
        %s2604 = smul.addr %s2603, 256
        %s2605 = scalar_lea.vmem [#allocation11], %s2604
        // Predicated region
        $region45: #{tpu_custom_call.1} parent=31 // pred_check
          %p2606 = pneg %p129
        $region46: #{tpu_custom_call.1} parent=31 // pred_check_branch
          %2608 = sbr.rel (%p2606) target = $region48
        $region47: #{tpu_custom_call.1} parent=31 // pred_region
          %s2609 = smul.u32 32, %s32
          %s2611 = ssub.s32 4096, 4096
          %2612 = vsyncadd %s2592, %s2611
          %s2613 = smul.addr %s2609, 2
          %s2614 = smul.addr %s31, 64
          %s2615 = sadd.s32 %s2613, %s2614
          %s2616 = smul.addr %s2615, 64
          %s2617 = scalar_lea.hbm %s3, %s2616
          %s2618 = sshll.u32 %s2595, 4
          %s2619 = int_to_ptr.vmem [resolvable:$true] %s2618
          %2624 = dma.vmem_to_hbm [thread:$0]  %s2619, 4096, %s2617, %s2592, 128, 128, 8
        $region48: #{tpu_custom_call.1} parent=31 // pred_fallthru
          _
        // Predicated region
        $region49: #{tpu_custom_call.1} parent=31 // pred_check
          %p2625 = pneg %p157
        $region50: #{tpu_custom_call.1} parent=31 // pred_check_branch
          %2627 = sbr.rel (%p2625) target = $region52
        $region51: #{tpu_custom_call.1} parent=31 // pred_region
          %s2628 = smul.u32 32, %s32
          %s2630 = ssub.s32 4096, 4096
          %2631 = vsyncadd %s2597, %s2630
          %s2632 = smul.addr %s2628, 2
          %s2633 = smul.addr %s31, 64
          %s2634 = sadd.s32 %s2632, %s2633
          %s2635 = smul.addr %s2634, 64
          %s2636 = scalar_lea.hbm %s4, %s2635
          %s2637 = sshll.u32 %s2600, 4
          %s2638 = int_to_ptr.vmem [resolvable:$true] %s2637
          %2643 = dma.vmem_to_hbm [thread:$0]  %s2638, 4096, %s2636, %s2597, 128, 128, 8
        $region52: #{tpu_custom_call.1} parent=31 // pred_fallthru
          _
        // Predicated region
        $region53: #{tpu_custom_call.1} parent=31 // pred_check
          %p2644 = pneg %p185
        $region54: #{tpu_custom_call.1} parent=31 // pred_check_branch
          %2646 = sbr.rel (%p2644) target = $region56
        $region55: #{tpu_custom_call.1} parent=31 // pred_region
          %s2647 = smul.u32 32, %s32
          %s2649 = ssub.s32 4096, 4096
          %2650 = vsyncadd %s2602, %s2649
          %s2651 = smul.addr %s2647, 2
          %s2652 = smul.addr %s31, 64
          %s2653 = sadd.s32 %s2651, %s2652
          %s2654 = smul.addr %s2653, 64
          %s2655 = scalar_lea.hbm %s5, %s2654
          %s2656 = sshll.u32 %s2605, 4
          %s2657 = int_to_ptr.vmem [resolvable:$true] %s2656
          %2662 = dma.vmem_to_hbm [thread:$0]  %s2657, 4096, %s2655, %s2602, 128, 128, 8
        $region56: #{tpu_custom_call.1} parent=31 // pred_fallthru
          _
      $region32: #{tpu_custom_call.1} parent=5 // pred_fallthru
        _
      %p2663 = scmp.le.s32.totalorder 2, %s22
      // Predicated region
      $region57: #{tpu_custom_call.1} parent=5 // pred_check
        %p2664 = pneg %p2663
      $region58: #{tpu_custom_call.1} parent=5 // pred_check_branch
        %2666 = sbr.rel (%p2664) target = $region60
      $region59: #{tpu_custom_call.1} parent=5 // pred_region
        %s2667 = ssub.s32 %s22, 2
        // Predicated region
        $region61: #{tpu_custom_call.1} parent=59 // pred_check
          %p2668 = pneg %p135
        $region62: #{tpu_custom_call.1} parent=59 // pred_check_branch
          %2670 = sbr.rel (%p2668) target = $region64
        $region63: #{tpu_custom_call.1} parent=59 // pred_region
          %s2671 = sand.u32 %s120, 1
          %s2672 = scalar_lea.sflag [#allocation4], %s2671
          %s2673 = sand.u32 %s120, 1
          %s2674 = smul.addr %s2673, 256
          %s2675 = scalar_lea.vmem [#allocation8], %s2674
          %2676 = dma.done %s2672, 4096
        $region64: #{tpu_custom_call.1} parent=59 // pred_fallthru
          _
        // Predicated region
        $region65: #{tpu_custom_call.1} parent=59 // pred_check
          %p2677 = pneg %p163
        $region66: #{tpu_custom_call.1} parent=59 // pred_check_branch
          %2679 = sbr.rel (%p2677) target = $region68
        $region67: #{tpu_custom_call.1} parent=59 // pred_region
          %s2680 = sand.u32 %s28, 1
          %s2681 = scalar_lea.sflag [#allocation10], %s2680
          %s2682 = sand.u32 %s148, 1
          %s2683 = smul.addr %s2682, 256
          %s2684 = scalar_lea.vmem [#allocation9], %s2683
          %2685 = dma.done %s2681, 4096
        $region68: #{tpu_custom_call.1} parent=59 // pred_fallthru
          _
        // Predicated region
        $region69: #{tpu_custom_call.1} parent=59 // pred_check
          %p2686 = pneg %p191
        $region70: #{tpu_custom_call.1} parent=59 // pred_check_branch
          %2688 = sbr.rel (%p2686) target = $region72
        $region71: #{tpu_custom_call.1} parent=59 // pred_region
          %s2689 = sand.u32 %s28, 1
          %s2690 = scalar_lea.sflag [#allocation10], %s2689
          %s2691 = sand.u32 %s176, 1
          %s2692 = smul.addr %s2691, 256
          %s2693 = scalar_lea.vmem [#allocation11], %s2692
          %2694 = dma.done %s2690, 4096
        $region72: #{tpu_custom_call.1} parent=59 // pred_fallthru
          _
      $region60: #{tpu_custom_call.1} parent=5 // pred_fallthru
        _
    $region6: #{tpu_custom_call.1} parent=1 // loop_footer
      %s26 = sadd.s32 1, %s22
    $region7: #{tpu_custom_call.1} parent=1 // loop_footer_branch
      %21 = sbr.rel target = $region3
    $region8: #{tpu_custom_call.1} parent=1 // loop_exit
      _
    %2695 = vsyncpa [#allocation3], 1
    %s2696 = scalar_lea.sflag [#allocation3], 1
    %2697 = vsyncpa %s2696, 1
    %2698 = vsyncpa [#allocation6], 1
    %2699 = vsyncpa [#allocation4], 1
    %s2700 = scalar_lea.sflag [#allocation4], 1
    %2701 = vsyncpa %s2700, 1
    %2702 = vsyncpa [#allocation10], 1
    %s2703 = scalar_lea.sflag [#allocation10], 1
    %2704 = vsyncpa %s2703, 1

</llo_original>
